<compile_context>
chip_gen: v7x
topology: tpu7x:2x2x1
jax: 0.10.0
libtpu: 0.0.40
codegen_flags: <defaults>
</compile_context>

<pallas_src>
import functools

import jax
import jax.numpy as jnp
from jax import lax
from jax.experimental import pallas as pl
from jax.experimental.pallas import tpu as pltpu

LN_EPS = 1e-5        # PyTorch nn.LayerNorm default eps
HEAD_PAD = 128       # lane-dense padded width of the fused [mu | log_std] head
_BIG = 3.0e38        # "no clamp" sentinel for the head lo/hi vectors


def _round_up(n, m):
    return ((n + m - 1) // m) * m


def _ln_single_pass(x, gamma, beta):
    """Single-pass LayerNorm: sum and sum-of-squares are independent reductions
    (can dual-issue on the XLUs) instead of the serialized two-pass chain."""
    n = x.shape[-1]
    s1 = jnp.sum(x, axis=-1, keepdims=True)
    s2 = jnp.sum(x * x, axis=-1, keepdims=True)
    mean = s1 * (1.0 / n)
    var = jnp.maximum(s2 * (1.0 / n) - mean * mean, 0.0)
    return (x - mean) * lax.rsqrt(var + LN_EPS) * gamma + beta


def actor_kernel(x_ref,                       # (Bt, 12, HWt)  caller dtype
                 w1_ref, b1_ref,              # (1, 12, 1), (1, 1)          f32
                 g1_ref, be1_ref,             # (1, HWpad)                  f32
                 w2_ref, b2_ref,              # (HWpad, 512) bf16, (1, 512) f32
                 g2_ref, be2_ref,             # (1, 512)                    f32
                 w3_ref, b3_ref,              # (512, 256) bf16, (1, 256)   f32
                 g3_ref, be3_ref,             # (1, 256)                    f32
                 wh_ref, bh_ref,              # (256, 128) bf16, (1, 128)   f32
                 lo_ref, hi_ref,              # (1, 128)                    f32
                 out_ref,                     # (Bt, 128) f32 [mu | log_std | 0-pad]
                 y1_scr, s1_scr, s2_scr,      # VMEM scratch
                 *, hw, hw_tile, n_chunks):
    # ---- Conv2d(12, 1, k=1) + ReLU on this HW chunk -------------------------
    # Broadcast multiply (VPU) + sublane reduce (XLU).  Upcast here so narrow
    # frame buffers (uint8 / bf16) can be shipped cheaply over HBM.
    x = x_ref[...].astype(jnp.float32)                            # (Bt, 12, HWt)
    u = jnp.sum(x * w1_ref[...], axis=1) + b1_ref[...]            # (Bt, HWt)
    u = jnp.maximum(u, 0.0)

    def finish(y1_pre, s1, s2):
        # LayerNorm((h, w)) from accumulated single-pass statistics.
        inv_n = 1.0 / float(hw)
        mean = s1 * inv_n
        var = jnp.maximum(s2 * inv_n - mean * mean, 0.0)
        y1 = (y1_pre - mean) * lax.rsqrt(var + LN_EPS) * g1_ref[...] + be1_ref[...]

        # Conv2d(1, 512, k=(h, w)) == Linear(HW -> 512)
        z2 = jnp.dot(y1.astype(jnp.bfloat16), w2_ref[...],
                     preferred_element_type=jnp.float32) + b2_ref[...]
        z2 = _ln_single_pass(jnp.maximum(z2, 0.0), g2_ref[...], be2_ref[...])

        # Conv2d(512, 256, k=1) == Linear(512 -> 256)
        z3 = jnp.dot(z2.astype(jnp.bfloat16), w3_ref[...],
                     preferred_element_type=jnp.float32) + b3_ref[...]
        z3 = _ln_single_pass(jnp.maximum(z3, 0.0), g3_ref[...], be3_ref[...])

        # fused heads: ReLU -> one lane-dense matmul [mu | log_std | pad];
        # clamp via precomputed per-column lo/hi vectors (2 VPU ops, no iota).
        feat = jnp.maximum(z3, 0.0)
        heads = jnp.dot(feat.astype(jnp.bfloat16), wh_ref[...],
                        preferred_element_type=jnp.float32) + bh_ref[...]
        out_ref[...] = jnp.minimum(jnp.maximum(heads, lo_ref[...]), hi_ref[...])

    if n_chunks == 1:
        # Monolithic HW path: everything stays in registers, no scratch round-trip.
        s1 = jnp.sum(u, axis=-1, keepdims=True)
        s2 = jnp.sum(u * u, axis=-1, keepdims=True)
        finish(u, s1, s2)
    else:
        k = pl.program_id(1)
        if hw != n_chunks * hw_tile:
            # last chunk is partial: zero the garbage tail columns so they do
            # not pollute the LN statistics (mean/var still divide by true hw,
            # and the matching w2 rows / gamma / beta are zero-padded).
            valid = hw - k * hw_tile
            col = lax.broadcasted_iota(jnp.int32, u.shape, 1)
            u = jnp.where(col < valid, u, 0.0)

        col0 = pl.multiple_of(k * hw_tile, 128)
        y1_scr[:, pl.ds(col0, hw_tile)] = u
        cs1 = jnp.sum(u, axis=-1, keepdims=True)
        cs2 = jnp.sum(u * u, axis=-1, keepdims=True)

        @pl.when(k == 0)
        def _():
            s1_scr[...] = jnp.zeros_like(s1_scr)
            s2_scr[...] = jnp.zeros_like(s2_scr)

        s1_scr[...] += cs1
        s2_scr[...] += cs2

        @pl.when(k == n_chunks - 1)
        def _():
            finish(y1_scr[...], s1_scr[...], s2_scr[...])


def init_params(key, h, w, n_actions=3):
    """Deterministic synthetic parameters (shapes match the PyTorch module)."""
    hw = h * w
    ks = jax.random.split(key, 10)

    def uni(k, shape, fan_in):
        bound = 1.0 / float(fan_in) ** 0.5
        return jax.random.uniform(k, shape, jnp.float32, -bound, bound)

    return dict(
        w1=uni(ks[0], (1, 12), 12),          # Conv2d(12,1,1) weight (flattened)
        b1=uni(ks[1], (1, 1), 12),
        g1=jnp.ones((1, hw), jnp.float32),   # LayerNorm((h,w)) affine
        be1=jnp.zeros((1, hw), jnp.float32),
        w2=uni(ks[2], (hw, 512), hw),        # Conv2d(1,512,(h,w)) weight, (in,out)
        b2=uni(ks[3], (1, 512), hw),
        g2=jnp.ones((1, 512), jnp.float32),
        be2=jnp.zeros((1, 512), jnp.float32),
        w3=uni(ks[4], (512, 256), 512),      # Conv2d(512,256,1) weight, (in,out)
        b3=uni(ks[5], (1, 256), 512),
        g3=jnp.ones((1, 256), jnp.float32),
        be3=jnp.zeros((1, 256), jnp.float32),
        wmu=uni(ks[6], (256, n_actions), 256),
        bmu=uni(ks[7], (1, n_actions), 256),
        wls=uni(ks[8], (256, n_actions), 256),
        bls=uni(ks[9], (1, n_actions), 256),
    )


def prepare_params(params):
    """One-time transform of module-layout params into kernel-ready arrays."""
    A = params["wmu"].shape[1]
    assert 2 * A <= HEAD_PAD
    wh = jnp.concatenate([params["wmu"], params["wls"]], axis=1)     # (256, 2A)
    bh = jnp.concatenate([params["bmu"], params["bls"]], axis=1)     # (1, 2A)
    wh = jnp.pad(wh, ((0, 0), (0, HEAD_PAD - 2 * A)))
    bh = jnp.pad(bh, ((0, 0), (0, HEAD_PAD - 2 * A)))
    # per-column clamp bounds: only the log_std columns [A, 2A) are clamped.
    lo = jnp.full((1, HEAD_PAD), -_BIG, jnp.float32).at[0, A:2 * A].set(-20.0)
    hi = jnp.full((1, HEAD_PAD), _BIG, jnp.float32).at[0, A:2 * A].set(-5.0)
    return dict(
        w1=params["w1"].reshape(1, -1, 1).astype(jnp.float32),       # (1, 12, 1)
        b1=params["b1"].astype(jnp.float32),                         # (1, 1)
        g1=params["g1"], be1=params["be1"],
        w2=params["w2"].astype(jnp.bfloat16), b2=params["b2"],
        g2=params["g2"], be2=params["be2"],
        w3=params["w3"].astype(jnp.bfloat16), b3=params["b3"],
        g3=params["g3"], be3=params["be3"],
        wh=wh.astype(jnp.bfloat16), bh=bh.astype(jnp.float32),
        lo=lo, hi=hi,
        n_actions=A,
    )


def _device_info():
    """(per-core VMEM capacity in bytes, lowercase device_kind)."""
    vmem_cap = 64 << 20                      # conservative default (v7x per-TC)
    kind = ""
    try:
        kind = jax.devices()[0].device_kind.lower()
    except Exception:
        pass
    try:
        vmem_cap = int(pltpu.get_tpu_info().vmem_capacity_bytes)
    except Exception:
        pass
    if "7" in kind:                          # v7x: 64 MiB per TensorCore
        vmem_cap = min(vmem_cap, 64 << 20)
    return vmem_cap, kind


def _plan_tiles(B, C, HW, x_itemsize, weight_bytes, *, batch_tile=None, hw_tile=None):
    """Pick (batch_tile, hw_tile, n_hw_chunks, vmem_limit_bytes).

    Goals from the perf review:
      * >= 2 (even) batch tiles whenever B > 8, so the x DMA is pipelined and
        v7x shards the batch across both TensorCores,
      * generation-aware VMEM cap (v7x = 64 MiB), resident weights budgeted as
        double-buffered (worst case),
      * chunk the HW axis when the monolithic (Bt, 12, HW) x block would not fit.
    """
    vmem_cap, kind = _device_info()
    plan_budget = min(int(0.70 * vmem_cap), 80 << 20)     # what we plan against
    vmem_limit = min(int(0.875 * vmem_cap), 100 << 20)    # what we request from Mosaic

    if "v5 lite" in kind or "v5e" in kind or "v5lite" in kind:
        bt_cap = 64        # v5e: ~0.8 TB/s HBM -> smaller tiles, more DMA overlap
    elif "v6" in kind:
        bt_cap = 256       # v6e: 2x256^2 MXU, amortize the ~0.35us per-step cost
    else:
        bt_cap = 128       # v7x / default: 64 MiB VMEM -> stay at 128

    if batch_tile is not None:
        bt = int(batch_tile)
    elif B <= 8:
        bt = B
    else:
        bt = min(bt_cap, max(8, _round_up(pl.cdiv(B, 2), 8)))   # >= 2 grid steps
        nb = pl.cdiv(B, bt)
        if nb > 1 and nb % 2 == 1:                               # prefer even counts (v7x)
            bt_even = max(8, _round_up(pl.cdiv(B, nb + 1), 8))
            if pl.cdiv(B, bt_even) % 2 == 0:
                bt = bt_even

    cpad = _round_up(C, 16)
    # Resident weights counted twice: the default pipeliner may double-buffer
    # them.  TODO(synk): once pl.Buffered(1) single-buffering of constant-
    # index_map inputs is confirmed on the target jax (pl.lower_as_mlir), attach
    # pipeline_mode=pl.Buffered(1) in _resident_spec and drop the 2x here.
    base = 2 * weight_bytes + (2 << 20)

    def act_bytes(bt_):                       # y1 scratch + f32 LN temporaries
        return 2 * bt_ * _round_up(HW, 128) * 4

    def x_bytes(bt_, hwt_):                   # double-buffered x chunk
        return 2 * bt_ * cpad * hwt_ * x_itemsize

    if hw_tile is not None:
        hwt = int(hw_tile)
        assert hwt == HW or hwt % 128 == 0, "hw_tile must be a multiple of 128"
    elif base + act_bytes(bt) + x_bytes(bt, HW) <= plan_budget:
        hwt = HW                              # monolithic: single HW chunk, no padding
    else:
        # shrink the batch tile only as far as needed for a minimal 128-wide chunk
        while bt > 8 and base + act_bytes(bt) + x_bytes(bt, 128) > plan_budget:
            bt -= 8
        avail = plan_budget - base - act_bytes(bt)
        hwt = int(avail // (2 * bt * cpad * x_itemsize))
        hwt = HW if hwt >= HW else max(128, (hwt // 128) * 128)

    if hwt >= HW:
        hwt = HW
    return bt, hwt, pl.cdiv(HW, hwt), vmem_limit


def _resident_spec(arr):
    """Full-array block with a constant index_map (weight stays resident)."""
    zeros = (0,) * arr.ndim
    return pl.BlockSpec(arr.shape, lambda i, k, _z=zeros: _z)


def actor_forward(state_nchw, kp, *, batch_tile=None, hw_tile=None):
    """state_nchw: (B, 12, H, W) -> (mu, log_std), each (B, n_actions).

    The input is consumed in the caller's dtype (f32 / bf16 / uint8 frames all
    work) and upcast to f32 inside the kernel; x dominates HBM traffic.
    """
    B, C, H, W = state_nchw.shape
    assert C == 12
    HW = H * W
    A = kp["n_actions"]
    x = state_nchw.reshape(B, C, HW)          # keep caller dtype

    weight_bytes = sum(int(v.size) * v.dtype.itemsize
                       for name, v in kp.items() if name != "n_actions")
    bt, hwt, nk, vmem_limit = _plan_tiles(
        B, C, HW, x.dtype.itemsize, weight_bytes,
        batch_tile=batch_tile, hw_tile=hw_tile)
    hw_pad = nk * hwt

    # Pad LN1 affine params and w2 rows to the chunked width: zero w2 rows and
    # zero gamma/beta make the padded columns inert.  (In production fold this
    # into prepare_params so it is not redone per call.)
    g1, be1, w2 = kp["g1"], kp["be1"], kp["w2"]
    if hw_pad != HW:
        pad = hw_pad - HW
        g1 = jnp.pad(g1, ((0, 0), (0, pad)))
        be1 = jnp.pad(be1, ((0, 0), (0, pad)))
        w2 = jnp.pad(w2, ((0, pad), (0, 0)))

    weights = (kp["w1"], kp["b1"], g1, be1,
               w2, kp["b2"], kp["g2"], kp["be2"],
               kp["w3"], kp["b3"], kp["g3"], kp["be3"],
               kp["wh"], kp["bh"], kp["lo"], kp["hi"])

    in_specs = ([pl.BlockSpec((bt, C, hwt), lambda i, k: (i, 0, k))]
                + [_resident_spec(w) for w in weights])
    out_spec = pl.BlockSpec((bt, HEAD_PAD), lambda i, k: (i, 0))
    grid = (pl.cdiv(B, bt), nk)

    scratch_shapes = [
        # pre-LN activations, resident across HW chunks (tiny dummy when nk == 1:
        # the monolithic path keeps everything in registers)
        pltpu.VMEM((bt, hw_pad) if nk > 1 else (8, 128), jnp.float32),
        pltpu.VMEM((bt, 1), jnp.float32),     # running sum    (LN1 stats)
        pltpu.VMEM((bt, 1), jnp.float32),     # running sum^2  (LN1 stats)
    ]

    flops = 2 * B * (C * HW + HW * 512 + 512 * 256 + 256 * HEAD_PAD)
    bytes_accessed = (int(x.size) * x.dtype.itemsize + weight_bytes
                      + B * HEAD_PAD * 4)

    out = pl.pallas_call(
        functools.partial(actor_kernel, hw=HW, hw_tile=hwt, n_chunks=nk),
        out_shape=jax.ShapeDtypeStruct((B, HEAD_PAD), jnp.float32),
        grid=grid,
        in_specs=in_specs,
        out_specs=out_spec,
        scratch_shapes=scratch_shapes,
        compiler_params=pltpu.CompilerParams(
            dimension_semantics=("parallel", "arbitrary"),
            vmem_limit_bytes=vmem_limit),
        cost_estimate=pl.CostEstimate(flops=flops, transcendentals=3 * B,
                                      bytes_accessed=bytes_accessed),
    )(x, *weights)

    return out[:, :A], out[:, A:2 * A]


# ----------------------------- pure-JAX reference -----------------------------

def _ln_ref(x, gamma, beta):
    mean = jnp.mean(x, axis=-1, keepdims=True)
    var = jnp.mean((x - mean) ** 2, axis=-1, keepdims=True)
    return (x - mean) * lax.rsqrt(var + LN_EPS) * gamma + beta


def actor_forward_ref(state_nchw, params):
    """Reference mirroring the kernel's bf16-operand / f32-accumulate matmuls."""
    B, C, H, W = state_nchw.shape
    x = state_nchw.reshape(B, C, H * W).astype(jnp.float32)

    def dot(a, w):
        return jnp.dot(a.astype(jnp.bfloat16), w.astype(jnp.bfloat16),
                       preferred_element_type=jnp.float32)

    u = jnp.einsum("bcp,c->bp", x, params["w1"][0]) + params["b1"][0, 0]
    y1 = _ln_ref(jax.nn.relu(u), params["g1"], params["be1"])
    z2 = _ln_ref(jax.nn.relu(dot(y1, params["w2"]) + params["b2"]),
                 params["g2"], params["be2"])
    z3 = _ln_ref(jax.nn.relu(dot(z2, params["w3"]) + params["b3"]),
                 params["g3"], params["be3"])
    feat = jax.nn.relu(z3)
    mu = dot(feat, params["wmu"]) + params["bmu"]
    ls = jnp.clip(dot(feat, params["wls"]) + params["bls"], -20.0, -5.0)
    return mu, ls


def _check(name, state, params, kp, **tile_overrides):
    mu, log_std = actor_forward(state, kp, **tile_overrides)
    jax.block_until_ready((mu, log_std))
    mu_ref, ls_ref = actor_forward_ref(state, params)
    B = state.shape[0]
    A = kp["n_actions"]
    assert mu.shape == (B, A) and log_std.shape == (B, A)
    assert jnp.allclose(mu, mu_ref, atol=1e-2, rtol=1e-2), \
        (name, float(jnp.max(jnp.abs(mu - mu_ref))))
    assert jnp.allclose(log_std, ls_ref, atol=1e-2, rtol=1e-2), \
        (name, float(jnp.max(jnp.abs(log_std - ls_ref))))
    assert bool(jnp.all(log_std >= -20.0)) and bool(jnp.all(log_std <= -5.0))


if __name__ == "__main__":
    key = jax.random.PRNGKey(0)
    k1, k2, k3, k4 = jax.random.split(key, 4)
    n_actions = 3

    # primary small config (12-channel symbolic frame), monolithic path
    B, C, H, W = 2, 12, 16, 16
    state = jax.random.normal(k1, (B, C, H, W), jnp.float32)
    params = init_params(k2, H, W, n_actions)
    kp = prepare_params(params)
    _check("monolithic", state, params, kp)

    # exercise the HW-chunked / partial-tile path with forced small tiles:
    # 2 batch tiles over B=10 (partial last tile) x 4 HW chunks of 128 over
    # HW=480 (partial tail chunk).
    B2, H2, W2 = 10, 20, 24
    state2 = jax.random.normal(k3, (B2, C, H2, W2), jnp.float32)
    params2 = init_params(k4, H2, W2, n_actions)
    kp2 = prepare_params(params2)
    _check("hw_chunked", state2, params2, kp2, batch_tile=8, hw_tile=128)

    print("KERNEL_OK")
</pallas_src>

<mosaic_0001>
module attributes {stable_mosaic.version = 11 : i64} {
  func.func @actor_kernel(%arg0: i32, %arg1: i32, %arg2: memref<2x12x256xf32, #tpu.memory_space<vmem>>, %arg3: memref<1x12x1xf32, #tpu.memory_space<vmem>>, %arg4: memref<1x1xf32, #tpu.memory_space<vmem>>, %arg5: memref<1x256xf32, #tpu.memory_space<vmem>>, %arg6: memref<1x256xf32, #tpu.memory_space<vmem>>, %arg7: memref<256x512xbf16, #tpu.memory_space<vmem>>, %arg8: memref<1x512xf32, #tpu.memory_space<vmem>>, %arg9: memref<1x512xf32, #tpu.memory_space<vmem>>, %arg10: memref<1x512xf32, #tpu.memory_space<vmem>>, %arg11: memref<512x256xbf16, #tpu.memory_space<vmem>>, %arg12: memref<1x256xf32, #tpu.memory_space<vmem>>, %arg13: memref<1x256xf32, #tpu.memory_space<vmem>>, %arg14: memref<1x256xf32, #tpu.memory_space<vmem>>, %arg15: memref<256x128xbf16, #tpu.memory_space<vmem>>, %arg16: memref<1x128xf32, #tpu.memory_space<vmem>>, %arg17: memref<1x128xf32, #tpu.memory_space<vmem>>, %arg18: memref<1x128xf32, #tpu.memory_space<vmem>>, %arg19: memref<2x128xf32, #tpu.memory_space<vmem>>, %arg20: memref<8x128xf32, #tpu.memory_space<vmem>>, %arg21: memref<2x1xf32, #tpu.memory_space<vmem>>, %arg22: memref<2x1xf32, #tpu.memory_space<vmem>>) attributes {dimension_semantics = [#tpu.dimension_semantics<parallel>, #tpu.dimension_semantics<arbitrary>], iteration_bounds = array<i64: 1, 1>, scalar_prefetch = 0 : i64, scratch_operands = 3 : i64, tpu.core_type = #tpu.core_type<tc>, window_params = [{transform_indices = @transform_0, window_bounds = array<i64: 2, 12, 256>}, {pipeline_mode = #tpu.pipeline_mode<synchronous>, transform_indices = @transform_1, window_bounds = array<i64: 1, 12, 1>}, {pipeline_mode = #tpu.pipeline_mode<synchronous>, transform_indices = @transform_2, window_bounds = array<i64: 1, 1>}, {pipeline_mode = #tpu.pipeline_mode<synchronous>, transform_indices = @transform_3, window_bounds = array<i64: 1, 256>}, {pipeline_mode = #tpu.pipeline_mode<synchronous>, transform_indices = @transform_4, window_bounds = array<i64: 1, 256>}, {pipeline_mode = #tpu.pipeline_mode<synchronous>, transform_indices = @transform_5, window_bounds = array<i64: 256, 512>}, {pipeline_mode = #tpu.pipeline_mode<synchronous>, transform_indices = @transform_6, window_bounds = array<i64: 1, 512>}, {pipeline_mode = #tpu.pipeline_mode<synchronous>, transform_indices = @transform_7, window_bounds = array<i64: 1, 512>}, {pipeline_mode = #tpu.pipeline_mode<synchronous>, transform_indices = @transform_8, window_bounds = array<i64: 1, 512>}, {pipeline_mode = #tpu.pipeline_mode<synchronous>, transform_indices = @transform_9, window_bounds = array<i64: 512, 256>}, {pipeline_mode = #tpu.pipeline_mode<synchronous>, transform_indices = @transform_10, window_bounds = array<i64: 1, 256>}, {pipeline_mode = #tpu.pipeline_mode<synchronous>, transform_indices = @transform_11, window_bounds = array<i64: 1, 256>}, {pipeline_mode = #tpu.pipeline_mode<synchronous>, transform_indices = @transform_12, window_bounds = array<i64: 1, 256>}, {pipeline_mode = #tpu.pipeline_mode<synchronous>, transform_indices = @transform_13, window_bounds = array<i64: 256, 128>}, {pipeline_mode = #tpu.pipeline_mode<synchronous>, transform_indices = @transform_14, window_bounds = array<i64: 1, 128>}, {pipeline_mode = #tpu.pipeline_mode<synchronous>, transform_indices = @transform_15, window_bounds = array<i64: 1, 128>}, {pipeline_mode = #tpu.pipeline_mode<synchronous>, transform_indices = @transform_16, window_bounds = array<i64: 1, 128>}, {transform_indices = @transform_17, window_bounds = array<i64: 2, 128>}]} {
    %c0 = arith.constant 0 : index
    %c0_0 = arith.constant 0 : index
    %c0_1 = arith.constant 0 : index
    %0 = vector.load %arg2[%c0, %c0_0, %c0_1] : memref<2x12x256xf32, #tpu.memory_space<vmem>>, vector<2x12x256xf32>
    %c0_2 = arith.constant 0 : index
    %c0_3 = arith.constant 0 : index
    %c0_4 = arith.constant 0 : index
    %1 = vector.load %arg3[%c0_2, %c0_3, %c0_4] : memref<1x12x1xf32, #tpu.memory_space<vmem>>, vector<1x12x1xf32>
    %2 = vector.broadcast %1 : vector<1x12x1xf32> to vector<2x12x256xf32>
    %3 = arith.mulf %0, %2 : vector<2x12x256xf32>
    %cst = arith.constant dense<0.000000e+00> : vector<2x256xf32>
    %4 = vector.multi_reduction <add>, %3, %cst [1] : vector<2x12x256xf32> to vector<2x256xf32>
    %c0_5 = arith.constant 0 : index
    %c0_6 = arith.constant 0 : index
    %5 = vector.load %arg4[%c0_5, %c0_6] : memref<1x1xf32, #tpu.memory_space<vmem>>, vector<1x1xf32>
    %6 = vector.broadcast %5 : vector<1x1xf32> to vector<2x256xf32>
    %7 = arith.addf %4, %6 : vector<2x256xf32>
    %cst_7 = arith.constant 0.000000e+00 : f32
    %8 = vector.broadcast %cst_7 : f32 to vector<2x256xf32>
    %9 = arith.maximumf %7, %8 : vector<2x256xf32>
    %cst_8 = arith.constant dense<0.000000e+00> : vector<2xf32>
    %10 = vector.multi_reduction <add>, %9, %cst_8 [1] : vector<2x256xf32> to vector<2xf32>
    %11 = vector.shape_cast %10 : vector<2xf32> to vector<2x1xf32>
    %12 = arith.mulf %9, %9 : vector<2x256xf32>
    %cst_9 = arith.constant dense<0.000000e+00> : vector<2xf32>
    %13 = vector.multi_reduction <add>, %12, %cst_9 [1] : vector<2x256xf32> to vector<2xf32>
    %14 = vector.shape_cast %13 : vector<2xf32> to vector<2x1xf32>
    %cst_10 = arith.constant 3.906250e-03 : f32
    %15 = vector.broadcast %cst_10 : f32 to vector<2x1xf32>
    %16 = arith.mulf %11, %15 : vector<2x1xf32>
    %cst_11 = arith.constant 3.906250e-03 : f32
    %17 = vector.broadcast %cst_11 : f32 to vector<2x1xf32>
    %18 = arith.mulf %14, %17 : vector<2x1xf32>
    %19 = arith.mulf %16, %16 : vector<2x1xf32>
    %20 = arith.subf %18, %19 : vector<2x1xf32>
    %cst_12 = arith.constant 0.000000e+00 : f32
    %21 = vector.broadcast %cst_12 : f32 to vector<2x1xf32>
    %22 = arith.maximumf %20, %21 : vector<2x1xf32>
    %23 = vector.broadcast %16 : vector<2x1xf32> to vector<2x256xf32>
    %24 = arith.subf %9, %23 : vector<2x256xf32>
    %cst_13 = arith.constant 9.99999974E-6 : f32
    %25 = vector.broadcast %cst_13 : f32 to vector<2x1xf32>
    %26 = arith.addf %22, %25 : vector<2x1xf32>
    %27 = math.rsqrt %26 : vector<2x1xf32>
    %28 = vector.broadcast %27 : vector<2x1xf32> to vector<2x256xf32>
    %29 = arith.mulf %24, %28 : vector<2x256xf32>
    %c0_14 = arith.constant 0 : index
    %c0_15 = arith.constant 0 : index
    %30 = vector.load %arg5[%c0_14, %c0_15] : memref<1x256xf32, #tpu.memory_space<vmem>>, vector<1x256xf32>
    %31 = vector.broadcast %30 : vector<1x256xf32> to vector<2x256xf32>
    %32 = arith.mulf %29, %31 : vector<2x256xf32>
    %c0_16 = arith.constant 0 : index
    %c0_17 = arith.constant 0 : index
    %33 = vector.load %arg6[%c0_16, %c0_17] : memref<1x256xf32, #tpu.memory_space<vmem>>, vector<1x256xf32>
    %34 = vector.broadcast %33 : vector<1x256xf32> to vector<2x256xf32>
    %35 = arith.addf %32, %34 : vector<2x256xf32>
    %36 = arith.truncf %35 : vector<2x256xf32> to vector<2x256xbf16>
    %c0_18 = arith.constant 0 : index
    %c0_19 = arith.constant 0 : index
    %37 = vector.load %arg7[%c0_18, %c0_19] : memref<256x512xbf16, #tpu.memory_space<vmem>>, vector<256x512xbf16>
    %cst_20 = arith.constant dense<0.000000e+00> : vector<2x512xf32>
    %38 = tpu.matmul %36, %37, %cst_20 {dimension_numbers = #tpu.dot_dimension_numbers<[1], [0], [0], [1], [0, 0, 1, 1], [], []>} : vector<2x256xbf16>, vector<256x512xbf16>, vector<2x512xf32> -> vector<2x512xf32>
    %c0_21 = arith.constant 0 : index
    %c0_22 = arith.constant 0 : index
    %39 = vector.load %arg8[%c0_21, %c0_22] : memref<1x512xf32, #tpu.memory_space<vmem>>, vector<1x512xf32>
    %40 = vector.broadcast %39 : vector<1x512xf32> to vector<2x512xf32>
    %41 = arith.addf %38, %40 : vector<2x512xf32>
    %cst_23 = arith.constant 0.000000e+00 : f32
    %42 = vector.broadcast %cst_23 : f32 to vector<2x512xf32>
    %43 = arith.maximumf %41, %42 : vector<2x512xf32>
    %c0_24 = arith.constant 0 : index
    %c0_25 = arith.constant 0 : index
    %44 = vector.load %arg9[%c0_24, %c0_25] : memref<1x512xf32, #tpu.memory_space<vmem>>, vector<1x512xf32>
    %c0_26 = arith.constant 0 : index
    %c0_27 = arith.constant 0 : index
    %45 = vector.load %arg10[%c0_26, %c0_27] : memref<1x512xf32, #tpu.memory_space<vmem>>, vector<1x512xf32>
    %cst_28 = arith.constant dense<0.000000e+00> : vector<2xf32>
    %46 = vector.multi_reduction <add>, %43, %cst_28 [1] : vector<2x512xf32> to vector<2xf32>
    %47 = vector.shape_cast %46 : vector<2xf32> to vector<2x1xf32>
    %48 = arith.mulf %43, %43 : vector<2x512xf32>
    %cst_29 = arith.constant dense<0.000000e+00> : vector<2xf32>
    %49 = vector.multi_reduction <add>, %48, %cst_29 [1] : vector<2x512xf32> to vector<2xf32>
    %50 = vector.shape_cast %49 : vector<2xf32> to vector<2x1xf32>
    %cst_30 = arith.constant 0.001953125 : f32
    %51 = vector.broadcast %cst_30 : f32 to vector<2x1xf32>
    %52 = arith.mulf %47, %51 : vector<2x1xf32>
    %cst_31 = arith.constant 0.001953125 : f32
    %53 = vector.broadcast %cst_31 : f32 to vector<2x1xf32>
    %54 = arith.mulf %50, %53 : vector<2x1xf32>
    %55 = arith.mulf %52, %52 : vector<2x1xf32>
    %56 = arith.subf %54, %55 : vector<2x1xf32>
    %cst_32 = arith.constant 0.000000e+00 : f32
    %57 = vector.broadcast %cst_32 : f32 to vector<2x1xf32>
    %58 = arith.maximumf %56, %57 : vector<2x1xf32>
    %59 = vector.broadcast %52 : vector<2x1xf32> to vector<2x512xf32>
    %60 = arith.subf %43, %59 : vector<2x512xf32>
    %cst_33 = arith.constant 9.99999974E-6 : f32
    %61 = vector.broadcast %cst_33 : f32 to vector<2x1xf32>
    %62 = arith.addf %58, %61 : vector<2x1xf32>
    %63 = math.rsqrt %62 : vector<2x1xf32>
    %64 = vector.broadcast %63 : vector<2x1xf32> to vector<2x512xf32>
    %65 = arith.mulf %60, %64 : vector<2x512xf32>
    %66 = vector.broadcast %44 : vector<1x512xf32> to vector<2x512xf32>
    %67 = arith.mulf %65, %66 : vector<2x512xf32>
    %68 = vector.broadcast %45 : vector<1x512xf32> to vector<2x512xf32>
    %69 = arith.addf %67, %68 : vector<2x512xf32>
    %70 = arith.truncf %69 : vector<2x512xf32> to vector<2x512xbf16>
    %c0_34 = arith.constant 0 : index
    %c0_35 = arith.constant 0 : index
    %71 = vector.load %arg11[%c0_34, %c0_35] : memref<512x256xbf16, #tpu.memory_space<vmem>>, vector<512x256xbf16>
    %cst_36 = arith.constant dense<0.000000e+00> : vector<2x256xf32>
    %72 = tpu.matmul %70, %71, %cst_36 {dimension_numbers = #tpu.dot_dimension_numbers<[1], [0], [0], [1], [0, 0, 1, 1], [], []>} : vector<2x512xbf16>, vector<512x256xbf16>, vector<2x256xf32> -> vector<2x256xf32>
    %c0_37 = arith.constant 0 : index
    %c0_38 = arith.constant 0 : index
    %73 = vector.load %arg12[%c0_37, %c0_38] : memref<1x256xf32, #tpu.memory_space<vmem>>, vector<1x256xf32>
    %74 = vector.broadcast %73 : vector<1x256xf32> to vector<2x256xf32>
    %75 = arith.addf %72, %74 : vector<2x256xf32>
    %cst_39 = arith.constant 0.000000e+00 : f32
    %76 = vector.broadcast %cst_39 : f32 to vector<2x256xf32>
    %77 = arith.maximumf %75, %76 : vector<2x256xf32>
    %c0_40 = arith.constant 0 : index
    %c0_41 = arith.constant 0 : index
    %78 = vector.load %arg13[%c0_40, %c0_41] : memref<1x256xf32, #tpu.memory_space<vmem>>, vector<1x256xf32>
    %c0_42 = arith.constant 0 : index
    %c0_43 = arith.constant 0 : index
    %79 = vector.load %arg14[%c0_42, %c0_43] : memref<1x256xf32, #tpu.memory_space<vmem>>, vector<1x256xf32>
    %cst_44 = arith.constant dense<0.000000e+00> : vector<2xf32>
    %80 = vector.multi_reduction <add>, %77, %cst_44 [1] : vector<2x256xf32> to vector<2xf32>
    %81 = vector.shape_cast %80 : vector<2xf32> to vector<2x1xf32>
    %82 = arith.mulf %77, %77 : vector<2x256xf32>
    %cst_45 = arith.constant dense<0.000000e+00> : vector<2xf32>
    %83 = vector.multi_reduction <add>, %82, %cst_45 [1] : vector<2x256xf32> to vector<2xf32>
    %84 = vector.shape_cast %83 : vector<2xf32> to vector<2x1xf32>
    %cst_46 = arith.constant 3.906250e-03 : f32
    %85 = vector.broadcast %cst_46 : f32 to vector<2x1xf32>
    %86 = arith.mulf %81, %85 : vector<2x1xf32>
    %cst_47 = arith.constant 3.906250e-03 : f32
    %87 = vector.broadcast %cst_47 : f32 to vector<2x1xf32>
    %88 = arith.mulf %84, %87 : vector<2x1xf32>
    %89 = arith.mulf %86, %86 : vector<2x1xf32>
    %90 = arith.subf %88, %89 : vector<2x1xf32>
    %cst_48 = arith.constant 0.000000e+00 : f32
    %91 = vector.broadcast %cst_48 : f32 to vector<2x1xf32>
    %92 = arith.maximumf %90, %91 : vector<2x1xf32>
    %93 = vector.broadcast %86 : vector<2x1xf32> to vector<2x256xf32>
    %94 = arith.subf %77, %93 : vector<2x256xf32>
    %cst_49 = arith.constant 9.99999974E-6 : f32
    %95 = vector.broadcast %cst_49 : f32 to vector<2x1xf32>
    %96 = arith.addf %92, %95 : vector<2x1xf32>
    %97 = math.rsqrt %96 : vector<2x1xf32>
    %98 = vector.broadcast %97 : vector<2x1xf32> to vector<2x256xf32>
    %99 = arith.mulf %94, %98 : vector<2x256xf32>
    %100 = vector.broadcast %78 : vector<1x256xf32> to vector<2x256xf32>
    %101 = arith.mulf %99, %100 : vector<2x256xf32>
    %102 = vector.broadcast %79 : vector<1x256xf32> to vector<2x256xf32>
    %103 = arith.addf %101, %102 : vector<2x256xf32>
    %cst_50 = arith.constant 0.000000e+00 : f32
    %104 = vector.broadcast %cst_50 : f32 to vector<2x256xf32>
    %105 = arith.maximumf %103, %104 : vector<2x256xf32>
    %106 = arith.truncf %105 : vector<2x256xf32> to vector<2x256xbf16>
    %c0_51 = arith.constant 0 : index
    %c0_52 = arith.constant 0 : index
    %107 = vector.load %arg15[%c0_51, %c0_52] : memref<256x128xbf16, #tpu.memory_space<vmem>>, vector<256x128xbf16>
    %cst_53 = arith.constant dense<0.000000e+00> : vector<2x128xf32>
    %108 = tpu.matmul %106, %107, %cst_53 {dimension_numbers = #tpu.dot_dimension_numbers<[1], [0], [0], [1], [0, 0, 1, 1], [], []>} : vector<2x256xbf16>, vector<256x128xbf16>, vector<2x128xf32> -> vector<2x128xf32>
    %c0_54 = arith.constant 0 : index
    %c0_55 = arith.constant 0 : index
    %109 = vector.load %arg16[%c0_54, %c0_55] : memref<1x128xf32, #tpu.memory_space<vmem>>, vector<1x128xf32>
    %110 = vector.broadcast %109 : vector<1x128xf32> to vector<2x128xf32>
    %111 = arith.addf %108, %110 : vector<2x128xf32>
    %c0_56 = arith.constant 0 : index
    %c0_57 = arith.constant 0 : index
    %112 = vector.load %arg17[%c0_56, %c0_57] : memref<1x128xf32, #tpu.memory_space<vmem>>, vector<1x128xf32>
    %113 = vector.broadcast %112 : vector<1x128xf32> to vector<2x128xf32>
    %114 = arith.maximumf %111, %113 : vector<2x128xf32>
    %c0_58 = arith.constant 0 : index
    %c0_59 = arith.constant 0 : index
    %115 = vector.load %arg18[%c0_58, %c0_59] : memref<1x128xf32, #tpu.memory_space<vmem>>, vector<1x128xf32>
    %116 = vector.broadcast %115 : vector<1x128xf32> to vector<2x128xf32>
    %117 = arith.minimumf %114, %116 : vector<2x128xf32>
    %c0_60 = arith.constant 0 : index
    %c0_61 = arith.constant 0 : index
    %118 = vector.load %arg19[%c0_60, %c0_61] : memref<2x128xf32, #tpu.memory_space<vmem>>, vector<2x128xf32>
    tpu.vector_store %arg19[%c0_60, %c0_61], %117 {strides = array<i32>} : memref<2x128xf32, #tpu.memory_space<vmem>>, vector<2x128xf32>,
    return
  }
  func.func @transform_0(%arg0: i32, %arg1: i32) -> (i32, i32, i32) {
    %c0_i32 = arith.constant 0 : i32
    %c0_i32_0 = arith.constant 0 : i32
    return %arg0, %c0_i32, %arg1 : i32, i32, i32
  }
  func.func @transform_1(%arg0: i32, %arg1: i32) -> (i32, i32, i32) {
    %c0_i32 = arith.constant 0 : i32
    %c0_i32_0 = arith.constant 0 : i32
    %c0_i32_1 = arith.constant 0 : i32
    %c0_i32_2 = arith.constant 0 : i32
    return %c0_i32, %c0_i32_0, %c0_i32_1 : i32, i32, i32
  }
  func.func @transform_2(%arg0: i32, %arg1: i32) -> (i32, i32) {
    %c0_i32 = arith.constant 0 : i32
    %c0_i32_0 = arith.constant 0 : i32
    %c0_i32_1 = arith.constant 0 : i32
    return %c0_i32, %c0_i32_0 : i32, i32
  }
  func.func @transform_3(%arg0: i32, %arg1: i32) -> (i32, i32) {
    %c0_i32 = arith.constant 0 : i32
    %c0_i32_0 = arith.constant 0 : i32
    %c0_i32_1 = arith.constant 0 : i32
    return %c0_i32, %c0_i32_0 : i32, i32
  }
  func.func @transform_4(%arg0: i32, %arg1: i32) -> (i32, i32) {
    %c0_i32 = arith.constant 0 : i32
    %c0_i32_0 = arith.constant 0 : i32
    %c0_i32_1 = arith.constant 0 : i32
    return %c0_i32, %c0_i32_0 : i32, i32
  }
  func.func @transform_5(%arg0: i32, %arg1: i32) -> (i32, i32) {
    %c0_i32 = arith.constant 0 : i32
    %c0_i32_0 = arith.constant 0 : i32
    %c0_i32_1 = arith.constant 0 : i32
    return %c0_i32, %c0_i32_0 : i32, i32
  }
  func.func @transform_6(%arg0: i32, %arg1: i32) -> (i32, i32) {
    %c0_i32 = arith.constant 0 : i32
    %c0_i32_0 = arith.constant 0 : i32
    %c0_i32_1 = arith.constant 0 : i32
    return %c0_i32, %c0_i32_0 : i32, i32
  }
  func.func @transform_7(%arg0: i32, %arg1: i32) -> (i32, i32) {
    %c0_i32 = arith.constant 0 : i32
    %c0_i32_0 = arith.constant 0 : i32
    %c0_i32_1 = arith.constant 0 : i32
    return %c0_i32, %c0_i32_0 : i32, i32
  }
  func.func @transform_8(%arg0: i32, %arg1: i32) -> (i32, i32) {
    %c0_i32 = arith.constant 0 : i32
    %c0_i32_0 = arith.constant 0 : i32
    %c0_i32_1 = arith.constant 0 : i32
    return %c0_i32, %c0_i32_0 : i32, i32
  }
  func.func @transform_9(%arg0: i32, %arg1: i32) -> (i32, i32) {
    %c0_i32 = arith.constant 0 : i32
    %c0_i32_0 = arith.constant 0 : i32
    %c0_i32_1 = arith.constant 0 : i32
    return %c0_i32, %c0_i32_0 : i32, i32
  }
  func.func @transform_10(%arg0: i32, %arg1: i32) -> (i32, i32) {
    %c0_i32 = arith.constant 0 : i32
    %c0_i32_0 = arith.constant 0 : i32
    %c0_i32_1 = arith.constant 0 : i32
    return %c0_i32, %c0_i32_0 : i32, i32
  }
  func.func @transform_11(%arg0: i32, %arg1: i32) -> (i32, i32) {
    %c0_i32 = arith.constant 0 : i32
    %c0_i32_0 = arith.constant 0 : i32
    %c0_i32_1 = arith.constant 0 : i32
    return %c0_i32, %c0_i32_0 : i32, i32
  }
  func.func @transform_12(%arg0: i32, %arg1: i32) -> (i32, i32) {
    %c0_i32 = arith.constant 0 : i32
    %c0_i32_0 = arith.constant 0 : i32
    %c0_i32_1 = arith.constant 0 : i32
    return %c0_i32, %c0_i32_0 : i32, i32
  }
  func.func @transform_13(%arg0: i32, %arg1: i32) -> (i32, i32) {
    %c0_i32 = arith.constant 0 : i32
    %c0_i32_0 = arith.constant 0 : i32
    %c0_i32_1 = arith.constant 0 : i32
    return %c0_i32, %c0_i32_0 : i32, i32
  }
  func.func @transform_14(%arg0: i32, %arg1: i32) -> (i32, i32) {
    %c0_i32 = arith.constant 0 : i32
    %c0_i32_0 = arith.constant 0 : i32
    %c0_i32_1 = arith.constant 0 : i32
    return %c0_i32, %c0_i32_0 : i32, i32
  }
  func.func @transform_15(%arg0: i32, %arg1: i32) -> (i32, i32) {
    %c0_i32 = arith.constant 0 : i32
    %c0_i32_0 = arith.constant 0 : i32
    %c0_i32_1 = arith.constant 0 : i32
    return %c0_i32, %c0_i32_0 : i32, i32
  }
  func.func @transform_16(%arg0: i32, %arg1: i32) -> (i32, i32) {
    %c0_i32 = arith.constant 0 : i32
    %c0_i32_0 = arith.constant 0 : i32
    %c0_i32_1 = arith.constant 0 : i32
    return %c0_i32, %c0_i32_0 : i32, i32
  }
  func.func @transform_17(%arg0: i32, %arg1: i32) -> (i32, i32) {
    %c0_i32 = arith.constant 0 : i32
    %c0_i32_0 = arith.constant 0 : i32
    return %arg0, %c0_i32 : i32, i32
  }
}

</mosaic_0001>

<llo_original>
// kernel: tpu_custom_call.1
$region0: #{tpu_custom_call.1}
  #allocation0 [shape = 'u32[]', space=smem, size = 0x4, offset = 0x4, fixed_abs, tag = 'smem constant byte address 0x4 - core index']
  #allocation1 [shape = 'u32[144,128]{1,0:T(1,128)}', space=vmem, size = 0x12000, scoped, tag = 'internal scratch']
  #allocation2 [shape = 'f32[8,128]{1,0:T(8,128)}', space=vmem, size = 0x1000, scoped, tag = 'scratch operand']
  #allocation3 [shape = 'f32[2,1]{1,0:T(2,128)}', space=vmem, size = 0x400, scoped, tag = 'scratch operand']
  #allocation4 [shape = 'f32[2,1]{1,0:T(2,128)}', space=vmem, size = 0x400, scoped, tag = 'scratch operand']
  #allocation5 [shape = 'f32[1,1]{1,0:T(1,128)S(1)}', space=vmem, size = 0x200, scoped, tag = 'scoped memory for tpu_custom_call.1']
  %s0 = inlined_call_operand.vmem [shape: f32[2,12,256], index: 0, kind: input, shape index: {}]
  %s1 = inlined_call_operand.vmem [shape: f32[1,12,1], index: 1, kind: input, shape index: {}]
  %s2 = inlined_call_operand.<no memory space> [shape: f32[1,1], index: 2, kind: input, shape index: {}]
  %s3 = inlined_call_operand.vmem [shape: f32[1,256], index: 3, kind: input, shape index: {}]
  %s4 = inlined_call_operand.vmem [shape: f32[1,256], index: 4, kind: input, shape index: {}]
  %s5 = inlined_call_operand.hbm [shape: bf16[256,512], index: 5, kind: input, shape index: {}]
  %s6 = inlined_call_operand.vmem [shape: f32[1,512], index: 6, kind: input, shape index: {}]
  %s7 = inlined_call_operand.vmem [shape: f32[1,512], index: 7, kind: input, shape index: {}]
  %s8 = inlined_call_operand.vmem [shape: f32[1,512], index: 8, kind: input, shape index: {}]
  %s9 = inlined_call_operand.hbm [shape: bf16[512,256], index: 9, kind: input, shape index: {}]
  %s10 = inlined_call_operand.vmem [shape: f32[1,256], index: 10, kind: input, shape index: {}]
  %s11 = inlined_call_operand.vmem [shape: f32[1,256], index: 11, kind: input, shape index: {}]
  %s12 = inlined_call_operand.vmem [shape: f32[1,256], index: 12, kind: input, shape index: {}]
  %s13 = inlined_call_operand.vmem [shape: bf16[256,128], index: 13, kind: input, shape index: {}]
  %s14 = inlined_call_operand.vmem [shape: f32[1,128], index: 14, kind: input, shape index: {}]
  %s15 = inlined_call_operand.vmem [shape: f32[1,128], index: 15, kind: input, shape index: {}]
  %s16 = inlined_call_operand.vmem [shape: f32[1,128], index: 16, kind: input, shape index: {}]
  %s17 = inlined_call_operand.hbm [shape: f32[2,128], index: 17, kind: output, shape index: {}]
  %s18 = sld [smem:[#allocation0]]
  $region86: #{tpu_custom_call.1} parent=0
    _
  %s20 = ssub.s32 1, %s18
  %s21 = scalar_select 0, %s20, %s18
  %v22 = vstv %s2
  %23 = vst [vmem:[#allocation5] sm:$0x1] %v22
  $region1: #{tpu_custom_call.1} parent=0
    #allocation6 [shape = 'u8[262144]{0}', space=vmem, size = 0x40000, scoped, tag = 'input window, operand 5, single buffered']
    #allocation7 [shape = 's32[1]{0}', space=sflag, size = 0x4, scoped, tag = 'scoped memory for tpu_custom_call.1']
    #allocation8 [shape = 's32[1]{0}', space=sflag, size = 0x4, scoped, tag = 'scoped memory for tpu_custom_call.1']
    #allocation9 [shape = 'u8[262144]{0}', space=vmem, size = 0x40000, scoped, tag = 'input window, operand 9, single buffered']
    #allocation10 [shape = 's32[1]{0}', space=sflag, size = 0x4, scoped, tag = 'scoped memory for tpu_custom_call.1']
    #allocation11 [shape = 'u8[1024]{0}', space=vmem, size = 0x400, scoped, tag = 'output window, operand 0, single buffered']
    %24 = vsyncpa [#allocation7], 0
    %25 = vsyncpa [#allocation10], 0
    %26 = vsyncpa [#allocation8], 0
    // Predicated region
    $region2: #{tpu_custom_call.1} parent=1 // pred_check
      _
    $region3: #{tpu_custom_call.1} parent=1 // pred_check_branch
      %28 = sbr.rel (0) target = $region5
    $region4: #{tpu_custom_call.1} parent=1 // pred_region
      _
    $region5: #{tpu_custom_call.1} parent=1 // pred_fallthru
      _
    // Predicated region
    $region6: #{tpu_custom_call.1} parent=1 // pred_check
      _
    $region7: #{tpu_custom_call.1} parent=1 // pred_check_branch
      %30 = sbr.rel (0) target = $region9
    $region8: #{tpu_custom_call.1} parent=1 // pred_region
      _
    $region9: #{tpu_custom_call.1} parent=1 // pred_fallthru
      _
    // Predicated region
    $region10: #{tpu_custom_call.1} parent=1 // pred_check
      _
    $region11: #{tpu_custom_call.1} parent=1 // pred_check_branch
      %32 = sbr.rel (0) target = $region13
    $region12: #{tpu_custom_call.1} parent=1 // pred_region
      _
    $region13: #{tpu_custom_call.1} parent=1 // pred_fallthru
      _
    // Predicated region
    $region14: #{tpu_custom_call.1} parent=1 // pred_check
      _
    $region15: #{tpu_custom_call.1} parent=1 // pred_check_branch
      %34 = sbr.rel (0) target = $region17
    $region16: #{tpu_custom_call.1} parent=1 // pred_region
      _
    $region17: #{tpu_custom_call.1} parent=1 // pred_fallthru
      _
    // Predicated region
    $region18: #{tpu_custom_call.1} parent=1 // pred_check
      _
    $region19: #{tpu_custom_call.1} parent=1 // pred_check_branch
      %36 = sbr.rel (0) target = $region21
    $region20: #{tpu_custom_call.1} parent=1 // pred_region
      _
    $region21: #{tpu_custom_call.1} parent=1 // pred_fallthru
      _
    // Predicated region
    $region22: #{tpu_custom_call.1} parent=1 // pred_check
      _
    $region23: #{tpu_custom_call.1} parent=1 // pred_check_branch
      %38 = sbr.rel (0) target = $region25
    $region24: #{tpu_custom_call.1} parent=1 // pred_region
      %s40 = ssub.s32 8192, 8192
      %41 = vsyncadd [#allocation7], %s40
      %s42 = sshll.u32 [#allocation6], 4
      %s43 = int_to_ptr.vmem [resolvable:$true] %s42
      %48 = dma.hbm_to_vmem [thread:$0]  %s5, 8192, %s43, [#allocation7], 256, 256, 16
    $region25: #{tpu_custom_call.1} parent=1 // pred_fallthru
      _
    // Predicated region
    $region26: #{tpu_custom_call.1} parent=1 // pred_check
      _
    $region27: #{tpu_custom_call.1} parent=1 // pred_check_branch
      %50 = sbr.rel (0) target = $region29
    $region28: #{tpu_custom_call.1} parent=1 // pred_region
      _
    $region29: #{tpu_custom_call.1} parent=1 // pred_fallthru
      _
    // Predicated region
    $region30: #{tpu_custom_call.1} parent=1 // pred_check
      _
    $region31: #{tpu_custom_call.1} parent=1 // pred_check_branch
      %52 = sbr.rel (0) target = $region33
    $region32: #{tpu_custom_call.1} parent=1 // pred_region
      _
    $region33: #{tpu_custom_call.1} parent=1 // pred_fallthru
      _
    // Predicated region
    $region34: #{tpu_custom_call.1} parent=1 // pred_check
      _
    $region35: #{tpu_custom_call.1} parent=1 // pred_check_branch
      %54 = sbr.rel (0) target = $region37
    $region36: #{tpu_custom_call.1} parent=1 // pred_region
      _
    $region37: #{tpu_custom_call.1} parent=1 // pred_fallthru
      _
    // Predicated region
    $region38: #{tpu_custom_call.1} parent=1 // pred_check
      _
    $region39: #{tpu_custom_call.1} parent=1 // pred_check_branch
      %56 = sbr.rel (0) target = $region41
    $region40: #{tpu_custom_call.1} parent=1 // pred_region
      %s58 = ssub.s32 8192, 8192
      %59 = vsyncadd [#allocation10], %s58
      %s60 = sshll.u32 [#allocation9], 4
      %s61 = int_to_ptr.vmem [resolvable:$true] %s60
      %66 = dma.hbm_to_vmem [thread:$0]  %s9, 8192, %s61, [#allocation10], 128, 128, 8
    $region41: #{tpu_custom_call.1} parent=1 // pred_fallthru
      _
    // Predicated region
    $region42: #{tpu_custom_call.1} parent=1 // pred_check
      _
    $region43: #{tpu_custom_call.1} parent=1 // pred_check_branch
      %68 = sbr.rel (0) target = $region45
    $region44: #{tpu_custom_call.1} parent=1 // pred_region
      _
    $region45: #{tpu_custom_call.1} parent=1 // pred_fallthru
      _
    // Predicated region
    $region46: #{tpu_custom_call.1} parent=1 // pred_check
      _
    $region47: #{tpu_custom_call.1} parent=1 // pred_check_branch
      %70 = sbr.rel (0) target = $region49
    $region48: #{tpu_custom_call.1} parent=1 // pred_region
      _
    $region49: #{tpu_custom_call.1} parent=1 // pred_fallthru
      _
    // Predicated region
    $region50: #{tpu_custom_call.1} parent=1 // pred_check
      _
    $region51: #{tpu_custom_call.1} parent=1 // pred_check_branch
      %72 = sbr.rel (0) target = $region53
    $region52: #{tpu_custom_call.1} parent=1 // pred_region
      _
    $region53: #{tpu_custom_call.1} parent=1 // pred_fallthru
      _
    // Predicated region
    $region54: #{tpu_custom_call.1} parent=1 // pred_check
      _
    $region55: #{tpu_custom_call.1} parent=1 // pred_check_branch
      %74 = sbr.rel (0) target = $region57
    $region56: #{tpu_custom_call.1} parent=1 // pred_region
      _
    $region57: #{tpu_custom_call.1} parent=1 // pred_fallthru
      _
    // Predicated region
    $region58: #{tpu_custom_call.1} parent=1 // pred_check
      _
    $region59: #{tpu_custom_call.1} parent=1 // pred_check_branch
      %76 = sbr.rel (0) target = $region61
    $region60: #{tpu_custom_call.1} parent=1 // pred_region
      _
    $region61: #{tpu_custom_call.1} parent=1 // pred_fallthru
      _
    // Predicated region
    $region62: #{tpu_custom_call.1} parent=1 // pred_check
      _
    $region63: #{tpu_custom_call.1} parent=1 // pred_check_branch
      %78 = sbr.rel (0) target = $region65
    $region64: #{tpu_custom_call.1} parent=1 // pred_region
      _
    $region65: #{tpu_custom_call.1} parent=1 // pred_fallthru
      _
    // Predicated region
    $region66: #{tpu_custom_call.1} parent=1 // pred_check
      _
    $region67: #{tpu_custom_call.1} parent=1 // pred_check_branch
      %80 = sbr.rel (0) target = $region69
    $region68: #{tpu_custom_call.1} parent=1 // pred_region
      _
    $region69: #{tpu_custom_call.1} parent=1 // pred_fallthru
      _
    // Predicated region
    $region70: #{tpu_custom_call.1} parent=1 // pred_check
      _
    $region71: #{tpu_custom_call.1} parent=1 // pred_check_branch
      %82 = sbr.rel (0) target = $region73
    $region72: #{tpu_custom_call.1} parent=1 // pred_region
      %83 = dma.done [#allocation7], 8192
    $region73: #{tpu_custom_call.1} parent=1 // pred_fallthru
      _
    // Predicated region
    $region74: #{tpu_custom_call.1} parent=1 // pred_check
      _
    $region75: #{tpu_custom_call.1} parent=1 // pred_check_branch
      %85 = sbr.rel (0) target = $region77
    $region76: #{tpu_custom_call.1} parent=1 // pred_region
      %86 = dma.done [#allocation10], 8192
    $region77: #{tpu_custom_call.1} parent=1 // pred_fallthru
      _
    %v88 = vld [vmem:[%s0] sm:$0xff]
    %v89 = vld [vmem:[%s0 + $0x8] sm:$0xff]
    %v90 = vld [vmem:[%s0 + $0x10] sm:$0xf]
    %v91 = vld [vmem:[%s0 + $0x18] sm:$0xf]
    %v92 = vld [vmem:[%s0 + $0x20] sm:$0xff]
    %v93 = vld [vmem:[%s0 + $0x28] sm:$0xff]
    %v94 = vld [vmem:[%s0 + $0x30] sm:$0xf]
    %v95 = vld [vmem:[%s0 + $0x38] sm:$0xf]
    %v96 = vld [vmem:[%s1] sm:$0xff]
    %v97 = vld [vmem:[%s1 + $0x8] sm:$0xf]
    %99 = vset.pattern.permute.xlu0 0
    %100 = vperm.xlu0 %99, %v96
    %v101 = vpop.permute.xlu0 %100
    %104 = vset.pattern.permute.xlu0 0
    %105 = vperm.xlu0 %104, %v97
    %v106 = vpop.permute.xlu0 %105
    %v108 = vmul.f32 %v88, %v101
    %v109 = vmul.f32 %v89, %v101
    %v110 = vmul.f32 %v90, %v106
    %v111 = vmul.f32 %v91, %v106
    %v112 = vmul.f32 %v92, %v101
    %v113 = vmul.f32 %v93, %v101
    %v114 = vmul.f32 %v94, %v106
    %v115 = vmul.f32 %v95, %v106
    %vm116 = vcmask 1043456
    %v117 = vsel %vm116, %v110, 0.0
    %v118 = vadd.f32 %v108, %v117
    %v119 = vrot.slane %v118, 4
    %v120 = vadd.f32 %v118, %v119
    %v121 = vrot.slane %v120, 2
    %v122 = vadd.f32 %v120, %v121
    %v123 = vrot.slane %v122, 1
    %v124 = vadd.f32 %v122, %v123
    %v125 = vsel %vm116, %v111, 0.0
    %v126 = vadd.f32 %v109, %v125
    %v127 = vrot.slane %v126, 4
    %v128 = vadd.f32 %v126, %v127
    %v129 = vrot.slane %v128, 2
    %v130 = vadd.f32 %v128, %v129
    %v131 = vrot.slane %v130, 1
    %v132 = vadd.f32 %v130, %v131
    %v133 = vsel %vm116, %v114, 0.0
    %v134 = vadd.f32 %v112, %v133
    %v135 = vrot.slane %v134, 4
    %v136 = vadd.f32 %v134, %v135
    %v137 = vrot.slane %v136, 2
    %v138 = vadd.f32 %v136, %v137
    %v139 = vrot.slane %v138, 1
    %v140 = vadd.f32 %v138, %v139
    %v141 = vsel %vm116, %v115, 0.0
    %v142 = vadd.f32 %v113, %v141
    %v143 = vrot.slane %v142, 4
    %v144 = vadd.f32 %v142, %v143
    %v145 = vrot.slane %v144, 2
    %v146 = vadd.f32 %v144, %v145
    %v147 = vrot.slane %v146, 1
    %v148 = vadd.f32 %v146, %v147
    %v149 = vld [vmem:[#allocation5] sm:$0x1]
    %v151 = vlaneseq
    %v152 = vshrl.u32 %v151, 7
    %v153 = vsub.s32 0, %v152
    %v154 = vrot.slane %v149, %v153
    %155 = vset.pattern.permute.xlu0 0
    %156 = vperm.xlu0 %155, %v154
    %v157 = vpop.permute.xlu0 %156
    %v159 = vadd.f32 %v124, %v157
    %v160 = vadd.f32 %v132, %v157
    %v161 = vadd.f32 %v140, %v157
    %v162 = vadd.f32 %v148, %v157
    %v163 = vmax.f32 %v159, 0.0
    %v164 = vmax.f32 %v160, 0.0
    %v165 = vmax.f32 %v161, 0.0
    %v166 = vmax.f32 %v162, 0.0
    %vm171 = vcmask 1041409
    %v172 = vsel %vm171, %v165, %v163
    %v173 = vsel %vm171, %v166, %v164
    %vm176 = vcmask 1041408
    %v177 = vsel %vm176, %v172, 0.0
    %v178 = vsel %vm176, %v173, 0.0
    %v179 = vadd.f32 %v177, %v178
    %180 = vadd.xlane.f32.xlu0 %v179
    %v181 = vpop.xlane.xlu0 %180
    %v182 = vmul.f32 %v163, %v163
    %v183 = vmul.f32 %v164, %v164
    %v184 = vmul.f32 %v165, %v165
    %v185 = vmul.f32 %v166, %v166
    %v190 = vsel %vm171, %v184, %v182
    %v191 = vsel %vm171, %v185, %v183
    %v194 = vsel %vm176, %v190, 0.0
    %v195 = vsel %vm176, %v191, 0.0
    %v196 = vadd.f32 %v194, %v195
    %197 = vadd.xlane.f32.xlu0 %v196
    %v198 = vpop.xlane.xlu0 %197
    %v199 = vmul.f32 %v181, 0.00390625
    %v200 = vmul.f32 %v198, 0.00390625
    %v201 = vmul.f32 %v199, %v199
    %v202 = vsub.f32 %v200, %v201
    %v203 = vmax.f32 %v202, 0.0
    %v205 = vrot.slane %v199, 1
    %v208 = vsub.f32 %v163, %v199
    %v209 = vsub.f32 %v164, %v199
    %v210 = vsub.f32 %v165, %v205
    %v211 = vsub.f32 %v166, %v205
    %v212 = vadd.f32 %v203, 1e-05
    %v213 = vrsqrt.pop %v212
    %v215 = vrot.slane %v213, 1
    %v218 = vmul.f32 %v208, %v213
    %v219 = vmul.f32 %v209, %v213
    %v220 = vmul.f32 %v210, %v215
    %v221 = vmul.f32 %v211, %v215
    %v222 = vld [vmem:[%s3] sm:$0x3]
    %v224 = vlaneseq
    %v225 = vshrl.u32 %v224, 7
    %v226 = vsub.s32 0, %v225
    %v227 = vrot.slane %v222, %v226
    %v228 = vlaneseq
    %v229 = vshrl.u32 %v228, 7
    %v230 = vsub.s32 1, %v229
    %v231 = vrot.slane %v222, %v230
    %v234 = vmul.f32 %v218, %v227
    %v235 = vmul.f32 %v219, %v231
    %v236 = vmul.f32 %v220, %v227
    %v237 = vmul.f32 %v221, %v231
    %v238 = vld [vmem:[%s4] sm:$0x3]
    %v240 = vlaneseq
    %v241 = vshrl.u32 %v240, 7
    %v242 = vsub.s32 0, %v241
    %v243 = vrot.slane %v238, %v242
    %v244 = vlaneseq
    %v245 = vshrl.u32 %v244, 7
    %v246 = vsub.s32 1, %v245
    %v247 = vrot.slane %v238, %v246
    %v250 = vadd.f32 %v234, %v243
    %v251 = vadd.f32 %v235, %v247
    %v252 = vadd.f32 %v236, %v243
    %v253 = vadd.f32 %v237, %v247
    %v254 = vpack.c.bf16 %v250, %v250
    %v255 = vpack.c.bf16 %v251, %v251
    %v256 = vpack.c.bf16 %v252, %v252
    %v257 = vpack.c.bf16 %v253, %v253
    %v258 = vld [vmem:[#allocation6] sm:$0xff]
    %v259 = vld [vmem:[#allocation6 + $0x8] sm:$0xff]
    %v260 = vld [vmem:[#allocation6 + $0x10] sm:$0xff]
    %v261 = vld [vmem:[#allocation6 + $0x18] sm:$0xff]
    %v262 = vld [vmem:[#allocation6 + $0x20] sm:$0xff]
    %v263 = vld [vmem:[#allocation6 + $0x28] sm:$0xff]
    %v264 = vld [vmem:[#allocation6 + $0x30] sm:$0xff]
    %v265 = vld [vmem:[#allocation6 + $0x38] sm:$0xff]
    %v266 = vld [vmem:[#allocation6 + $0x40] sm:$0xff]
    %v267 = vld [vmem:[#allocation6 + $0x48] sm:$0xff]
    %v268 = vld [vmem:[#allocation6 + $0x50] sm:$0xff]
    %v269 = vld [vmem:[#allocation6 + $0x58] sm:$0xff]
    %v270 = vld [vmem:[#allocation6 + $0x60] sm:$0xff]
    %v271 = vld [vmem:[#allocation6 + $0x68] sm:$0xff]
    %v272 = vld [vmem:[#allocation6 + $0x70] sm:$0xff]
    %v273 = vld [vmem:[#allocation6 + $0x78] sm:$0xff]
    %v274 = vld [vmem:[#allocation6 + $0x80] sm:$0xff]
    %v275 = vld [vmem:[#allocation6 + $0x88] sm:$0xff]
    %v276 = vld [vmem:[#allocation6 + $0x90] sm:$0xff]
    %v277 = vld [vmem:[#allocation6 + $0x98] sm:$0xff]
    %v278 = vld [vmem:[#allocation6 + $0xa0] sm:$0xff]
    %v279 = vld [vmem:[#allocation6 + $0xa8] sm:$0xff]
    %v280 = vld [vmem:[#allocation6 + $0xb0] sm:$0xff]
    %v281 = vld [vmem:[#allocation6 + $0xb8] sm:$0xff]
    %v282 = vld [vmem:[#allocation6 + $0xc0] sm:$0xff]
    %v283 = vld [vmem:[#allocation6 + $0xc8] sm:$0xff]
    %v284 = vld [vmem:[#allocation6 + $0xd0] sm:$0xff]
    %v285 = vld [vmem:[#allocation6 + $0xd8] sm:$0xff]
    %v286 = vld [vmem:[#allocation6 + $0xe0] sm:$0xff]
    %v287 = vld [vmem:[#allocation6 + $0xe8] sm:$0xff]
    %v288 = vld [vmem:[#allocation6 + $0xf0] sm:$0xff]
    %v289 = vld [vmem:[#allocation6 + $0xf8] sm:$0xff]
    %v290 = vld [vmem:[#allocation6 + $0x100] sm:$0xff]
    %v291 = vld [vmem:[#allocation6 + $0x108] sm:$0xff]
    %v292 = vld [vmem:[#allocation6 + $0x110] sm:$0xff]
    %v293 = vld [vmem:[#allocation6 + $0x118] sm:$0xff]
    %v294 = vld [vmem:[#allocation6 + $0x120] sm:$0xff]
    %v295 = vld [vmem:[#allocation6 + $0x128] sm:$0xff]
    %v296 = vld [vmem:[#allocation6 + $0x130] sm:$0xff]
    %v297 = vld [vmem:[#allocation6 + $0x138] sm:$0xff]
    %v298 = vld [vmem:[#allocation6 + $0x140] sm:$0xff]
    %v299 = vld [vmem:[#allocation6 + $0x148] sm:$0xff]
    %v300 = vld [vmem:[#allocation6 + $0x150] sm:$0xff]
    %v301 = vld [vmem:[#allocation6 + $0x158] sm:$0xff]
    %v302 = vld [vmem:[#allocation6 + $0x160] sm:$0xff]
    %v303 = vld [vmem:[#allocation6 + $0x168] sm:$0xff]
    %v304 = vld [vmem:[#allocation6 + $0x170] sm:$0xff]
    %v305 = vld [vmem:[#allocation6 + $0x178] sm:$0xff]
    %v306 = vld [vmem:[#allocation6 + $0x180] sm:$0xff]
    %v307 = vld [vmem:[#allocation6 + $0x188] sm:$0xff]
    %v308 = vld [vmem:[#allocation6 + $0x190] sm:$0xff]
    %v309 = vld [vmem:[#allocation6 + $0x198] sm:$0xff]
    %v310 = vld [vmem:[#allocation6 + $0x1a0] sm:$0xff]
    %v311 = vld [vmem:[#allocation6 + $0x1a8] sm:$0xff]
    %v312 = vld [vmem:[#allocation6 + $0x1b0] sm:$0xff]
    %v313 = vld [vmem:[#allocation6 + $0x1b8] sm:$0xff]
    %v314 = vld [vmem:[#allocation6 + $0x1c0] sm:$0xff]
    %v315 = vld [vmem:[#allocation6 + $0x1c8] sm:$0xff]
    %v316 = vld [vmem:[#allocation6 + $0x1d0] sm:$0xff]
    %v317 = vld [vmem:[#allocation6 + $0x1d8] sm:$0xff]
    %v318 = vld [vmem:[#allocation6 + $0x1e0] sm:$0xff]
    %v319 = vld [vmem:[#allocation6 + $0x1e8] sm:$0xff]
    %v320 = vld [vmem:[#allocation6 + $0x1f0] sm:$0xff]
    %v321 = vld [vmem:[#allocation6 + $0x1f8] sm:$0xff]
    %v322 = vld [vmem:[%s6] sm:$0xf]
    %v324 = vlaneseq
    %v325 = vshrl.u32 %v324, 7
    %v326 = vsub.s32 0, %v325
    %v327 = vrot.slane %v322, %v326
    %v328 = vlaneseq
    %v329 = vshrl.u32 %v328, 7
    %v330 = vsub.s32 1, %v329
    %v331 = vrot.slane %v322, %v330
    %v332 = vlaneseq
    %v333 = vshrl.u32 %v332, 7
    %v334 = vsub.s32 2, %v333
    %v335 = vrot.slane %v322, %v334
    %v336 = vlaneseq
    %v337 = vshrl.u32 %v336, 7
    %v338 = vsub.s32 3, %v337
    %v339 = vrot.slane %v322, %v338
    %v348 = vunpack.c.l.b16 %v254
    %v349 = vunpack.c.l.b16 %v255
    %v350 = vunpack.c.l.b16 %v256
    %v351 = vunpack.c.l.b16 %v257
    %v352 = vrot.slane %v350, 7
    %v353 = vsel %vm171, %v352, %v348
    %v354 = vrot.slane %v351, 7
    %v355 = vsel %vm171, %v354, %v349
    %v356 = vpack.c.b16 %v353, %v353
    %v357 = vpack.c.b16 %v355, %v355
    %v424 = vunpack.c.l.b16 %v258
    %v425 = vunpack.c.h.b16 %v258
    %v426 = vunpack.c.l.b16 %v259
    %v427 = vunpack.c.h.b16 %v259
    %v428 = vunpack.c.l.b16 %v260
    %v429 = vunpack.c.h.b16 %v260
    %v430 = vunpack.c.l.b16 %v261
    %v431 = vunpack.c.h.b16 %v261
    %v432 = vunpack.c.l.b16 %v262
    %v433 = vunpack.c.h.b16 %v262
    %v434 = vunpack.c.l.b16 %v263
    %v435 = vunpack.c.h.b16 %v263
    %v436 = vunpack.c.l.b16 %v264
    %v437 = vunpack.c.h.b16 %v264
    %v438 = vunpack.c.l.b16 %v265
    %v439 = vunpack.c.h.b16 %v265
    %v440 = vunpack.c.l.b16 %v266
    %v441 = vunpack.c.h.b16 %v266
    %v442 = vunpack.c.l.b16 %v267
    %v443 = vunpack.c.h.b16 %v267
    %v444 = vunpack.c.l.b16 %v268
    %v445 = vunpack.c.h.b16 %v268
    %v446 = vunpack.c.l.b16 %v269
    %v447 = vunpack.c.h.b16 %v269
    %v448 = vunpack.c.l.b16 %v270
    %v449 = vunpack.c.h.b16 %v270
    %v450 = vunpack.c.l.b16 %v271
    %v451 = vunpack.c.h.b16 %v271
    %v452 = vunpack.c.l.b16 %v272
    %v453 = vunpack.c.h.b16 %v272
    %v454 = vunpack.c.l.b16 %v273
    %v455 = vunpack.c.h.b16 %v273
    %v456 = vunpack.c.l.b16 %v274
    %v457 = vunpack.c.h.b16 %v274
    %v458 = vunpack.c.l.b16 %v275
    %v459 = vunpack.c.h.b16 %v275
    %v460 = vunpack.c.l.b16 %v276
    %v461 = vunpack.c.h.b16 %v276
    %v462 = vunpack.c.l.b16 %v277
    %v463 = vunpack.c.h.b16 %v277
    %v464 = vunpack.c.l.b16 %v278
    %v465 = vunpack.c.h.b16 %v278
    %v466 = vunpack.c.l.b16 %v279
    %v467 = vunpack.c.h.b16 %v279
    %v468 = vunpack.c.l.b16 %v280
    %v469 = vunpack.c.h.b16 %v280
    %v470 = vunpack.c.l.b16 %v281
    %v471 = vunpack.c.h.b16 %v281
    %v472 = vunpack.c.l.b16 %v282
    %v473 = vunpack.c.h.b16 %v282
    %v474 = vunpack.c.l.b16 %v283
    %v475 = vunpack.c.h.b16 %v283
    %v476 = vunpack.c.l.b16 %v284
    %v477 = vunpack.c.h.b16 %v284
    %v478 = vunpack.c.l.b16 %v285
    %v479 = vunpack.c.h.b16 %v285
    %v480 = vunpack.c.l.b16 %v286
    %v481 = vunpack.c.h.b16 %v286
    %v482 = vunpack.c.l.b16 %v287
    %v483 = vunpack.c.h.b16 %v287
    %v484 = vunpack.c.l.b16 %v288
    %v485 = vunpack.c.h.b16 %v288
    %v486 = vunpack.c.l.b16 %v289
    %v487 = vunpack.c.h.b16 %v289
    %v488 = vunpack.c.l.b16 %v290
    %v489 = vunpack.c.h.b16 %v290
    %v490 = vunpack.c.l.b16 %v291
    %v491 = vunpack.c.h.b16 %v291
    %v492 = vunpack.c.l.b16 %v292
    %v493 = vunpack.c.h.b16 %v292
    %v494 = vunpack.c.l.b16 %v293
    %v495 = vunpack.c.h.b16 %v293
    %v496 = vunpack.c.l.b16 %v294
    %v497 = vunpack.c.h.b16 %v294
    %v498 = vunpack.c.l.b16 %v295
    %v499 = vunpack.c.h.b16 %v295
    %v500 = vunpack.c.l.b16 %v296
    %v501 = vunpack.c.h.b16 %v296
    %v502 = vunpack.c.l.b16 %v297
    %v503 = vunpack.c.h.b16 %v297
    %v504 = vunpack.c.l.b16 %v298
    %v505 = vunpack.c.h.b16 %v298
    %v506 = vunpack.c.l.b16 %v299
    %v507 = vunpack.c.h.b16 %v299
    %v508 = vunpack.c.l.b16 %v300
    %v509 = vunpack.c.h.b16 %v300
    %v510 = vunpack.c.l.b16 %v301
    %v511 = vunpack.c.h.b16 %v301
    %v512 = vunpack.c.l.b16 %v302
    %v513 = vunpack.c.h.b16 %v302
    %v514 = vunpack.c.l.b16 %v303
    %v515 = vunpack.c.h.b16 %v303
    %v516 = vunpack.c.l.b16 %v304
    %v517 = vunpack.c.h.b16 %v304
    %v518 = vunpack.c.l.b16 %v305
    %v519 = vunpack.c.h.b16 %v305
    %v520 = vunpack.c.l.b16 %v306
    %v521 = vunpack.c.h.b16 %v306
    %v522 = vunpack.c.l.b16 %v307
    %v523 = vunpack.c.h.b16 %v307
    %v524 = vunpack.c.l.b16 %v308
    %v525 = vunpack.c.h.b16 %v308
    %v526 = vunpack.c.l.b16 %v309
    %v527 = vunpack.c.h.b16 %v309
    %v528 = vunpack.c.l.b16 %v310
    %v529 = vunpack.c.h.b16 %v310
    %v530 = vunpack.c.l.b16 %v311
    %v531 = vunpack.c.h.b16 %v311
    %v532 = vunpack.c.l.b16 %v312
    %v533 = vunpack.c.h.b16 %v312
    %v534 = vunpack.c.l.b16 %v313
    %v535 = vunpack.c.h.b16 %v313
    %v536 = vunpack.c.l.b16 %v314
    %v537 = vunpack.c.h.b16 %v314
    %v538 = vunpack.c.l.b16 %v315
    %v539 = vunpack.c.h.b16 %v315
    %v540 = vunpack.c.l.b16 %v316
    %v541 = vunpack.c.h.b16 %v316
    %v542 = vunpack.c.l.b16 %v317
    %v543 = vunpack.c.h.b16 %v317
    %v544 = vunpack.c.l.b16 %v318
    %v545 = vunpack.c.h.b16 %v318
    %v546 = vunpack.c.l.b16 %v319
    %v547 = vunpack.c.h.b16 %v319
    %v548 = vunpack.c.l.b16 %v320
    %v549 = vunpack.c.h.b16 %v320
    %v550 = vunpack.c.l.b16 %v321
    %v551 = vunpack.c.h.b16 %v321
    %v552 = vpack.c.b16 %v428, %v424
    %v553 = vpack.c.b16 %v429, %v425
    %v554 = vpack.c.b16 %v430, %v426
    %v555 = vpack.c.b16 %v431, %v427
    %v556 = vpack.c.b16 %v436, %v432
    %v557 = vpack.c.b16 %v437, %v433
    %v558 = vpack.c.b16 %v438, %v434
    %v559 = vpack.c.b16 %v439, %v435
    %v560 = vpack.c.b16 %v444, %v440
    %v561 = vpack.c.b16 %v445, %v441
    %v562 = vpack.c.b16 %v446, %v442
    %v563 = vpack.c.b16 %v447, %v443
    %v564 = vpack.c.b16 %v452, %v448
    %v565 = vpack.c.b16 %v453, %v449
    %v566 = vpack.c.b16 %v454, %v450
    %v567 = vpack.c.b16 %v455, %v451
    %v568 = vpack.c.b16 %v460, %v456
    %v569 = vpack.c.b16 %v461, %v457
    %v570 = vpack.c.b16 %v462, %v458
    %v571 = vpack.c.b16 %v463, %v459
    %v572 = vpack.c.b16 %v468, %v464
    %v573 = vpack.c.b16 %v469, %v465
    %v574 = vpack.c.b16 %v470, %v466
    %v575 = vpack.c.b16 %v471, %v467
    %v576 = vpack.c.b16 %v476, %v472
    %v577 = vpack.c.b16 %v477, %v473
    %v578 = vpack.c.b16 %v478, %v474
    %v579 = vpack.c.b16 %v479, %v475
    %v580 = vpack.c.b16 %v484, %v480
    %v581 = vpack.c.b16 %v485, %v481
    %v582 = vpack.c.b16 %v486, %v482
    %v583 = vpack.c.b16 %v487, %v483
    %v584 = vpack.c.b16 %v492, %v488
    %v585 = vpack.c.b16 %v493, %v489
    %v586 = vpack.c.b16 %v494, %v490
    %v587 = vpack.c.b16 %v495, %v491
    %v588 = vpack.c.b16 %v500, %v496
    %v589 = vpack.c.b16 %v501, %v497
    %v590 = vpack.c.b16 %v502, %v498
    %v591 = vpack.c.b16 %v503, %v499
    %v592 = vpack.c.b16 %v508, %v504
    %v593 = vpack.c.b16 %v509, %v505
    %v594 = vpack.c.b16 %v510, %v506
    %v595 = vpack.c.b16 %v511, %v507
    %v596 = vpack.c.b16 %v516, %v512
    %v597 = vpack.c.b16 %v517, %v513
    %v598 = vpack.c.b16 %v518, %v514
    %v599 = vpack.c.b16 %v519, %v515
    %v600 = vpack.c.b16 %v524, %v520
    %v601 = vpack.c.b16 %v525, %v521
    %v602 = vpack.c.b16 %v526, %v522
    %v603 = vpack.c.b16 %v527, %v523
    %v604 = vpack.c.b16 %v532, %v528
    %v605 = vpack.c.b16 %v533, %v529
    %v606 = vpack.c.b16 %v534, %v530
    %v607 = vpack.c.b16 %v535, %v531
    %v608 = vpack.c.b16 %v540, %v536
    %v609 = vpack.c.b16 %v541, %v537
    %v610 = vpack.c.b16 %v542, %v538
    %v611 = vpack.c.b16 %v543, %v539
    %v612 = vpack.c.b16 %v548, %v544
    %v613 = vpack.c.b16 %v549, %v545
    %v614 = vpack.c.b16 %v550, %v546
    %v615 = vpack.c.b16 %v551, %v547
    %680 = vmatprep.subr.bf16.mxu0 %v553
    %681 = vmatpush1.bf16.msra.mxu0 %v552
    %682 = vmatprep.subr.bf16.mxu0 %v557
    %683 = vmatpush1.bf16.msra.mxu0 %v556
    %684 = vmatprep.subr.bf16.mxu0 %v561
    %685 = vmatpush1.bf16.msra.mxu0 %v560
    %686 = vmatprep.subr.bf16.mxu0 %v565
    %687 = vmatpush1.bf16.msra.mxu0 %v564
    %688 = vmatprep.subr.bf16.mxu0 %v569
    %689 = vmatpush1.bf16.msra.mxu0 %v568
    %690 = vmatprep.subr.bf16.mxu0 %v573
    %691 = vmatpush1.bf16.msra.mxu0 %v572
    %692 = vmatprep.subr.bf16.mxu0 %v577
    %693 = vmatpush1.bf16.msra.mxu0 %v576
    %694 = vmatprep.subr.bf16.mxu0 %v581
    %695 = vmatpush1.bf16.msra.mxu0 %v580
    %696 = vmatprep.subr.bf16.mxu0 %v585
    %697 = vmatpush1.bf16.msra.mxu0 %v584
    %698 = vmatprep.subr.bf16.mxu0 %v589
    %699 = vmatpush1.bf16.msra.mxu0 %v588
    %700 = vmatprep.subr.bf16.mxu0 %v593
    %701 = vmatpush1.bf16.msra.mxu0 %v592
    %702 = vmatprep.subr.bf16.mxu0 %v597
    %703 = vmatpush1.bf16.msra.mxu0 %v596
    %704 = vmatprep.subr.bf16.mxu0 %v601
    %705 = vmatpush1.bf16.msra.mxu0 %v600
    %706 = vmatprep.subr.bf16.mxu0 %v605
    %707 = vmatpush1.bf16.msra.mxu0 %v604
    %708 = vmatprep.subr.bf16.mxu0 %v609
    %709 = vmatpush1.bf16.msra.mxu0 %v608
    %710 = vmatprep.subr.bf16.mxu0 %v613
    %711 = vmatpush1.bf16.msra.mxu0 %v612
    %712 = vmatprep.mubr.bf16.mxu0 %v357
    %713 = vmatmul.mubr.bf16.gmra.mrb[0].mxu0 %v356
    %v714 = vpop.f32.mrb[0].mxu0
    %v715 = vadd.f32 %v327, %v714
    %v716 = vpop.f32.mrb[0].mxu0
    %v717 = vadd.f32 %v331, %v716
    %v718 = vpop.f32.mrb[0].mxu0
    %v719 = vpop.f32.mrb[0].mxu0
    %720 = vdwg.mxu0
    %721 = vmatprep.subr.bf16.mxu0 %v555
    %722 = vmatpush1.bf16.msra.mxu0 %v554
    %723 = vmatprep.subr.bf16.mxu0 %v559
    %724 = vmatpush1.bf16.msra.mxu0 %v558
    %725 = vmatprep.subr.bf16.mxu0 %v563
    %726 = vmatpush1.bf16.msra.mxu0 %v562
    %727 = vmatprep.subr.bf16.mxu0 %v567
    %728 = vmatpush1.bf16.msra.mxu0 %v566
    %729 = vmatprep.subr.bf16.mxu0 %v571
    %730 = vmatpush1.bf16.msra.mxu0 %v570
    %731 = vmatprep.subr.bf16.mxu0 %v575
    %732 = vmatpush1.bf16.msra.mxu0 %v574
    %733 = vmatprep.subr.bf16.mxu0 %v579
    %734 = vmatpush1.bf16.msra.mxu0 %v578
    %735 = vmatprep.subr.bf16.mxu0 %v583
    %736 = vmatpush1.bf16.msra.mxu0 %v582
    %737 = vmatprep.subr.bf16.mxu0 %v587
    %738 = vmatpush1.bf16.msra.mxu0 %v586
    %739 = vmatprep.subr.bf16.mxu0 %v591
    %740 = vmatpush1.bf16.msra.mxu0 %v590
    %741 = vmatprep.subr.bf16.mxu0 %v595
    %742 = vmatpush1.bf16.msra.mxu0 %v594
    %743 = vmatprep.subr.bf16.mxu0 %v599
    %744 = vmatpush1.bf16.msra.mxu0 %v598
    %745 = vmatprep.subr.bf16.mxu0 %v603
    %746 = vmatpush1.bf16.msra.mxu0 %v602
    %747 = vmatprep.subr.bf16.mxu0 %v607
    %748 = vmatpush1.bf16.msra.mxu0 %v606
    %749 = vmatprep.subr.bf16.mxu0 %v611
    %750 = vmatpush1.bf16.msra.mxu0 %v610
    %751 = vmatprep.subr.bf16.mxu0 %v615
    %752 = vmatpush1.bf16.msra.mxu0 %v614
    %753 = vmatprep.mubr.bf16.mxu0 %v357
    %754 = vmatmul.mubr.bf16.gmra.mrb[0].mxu0 %v356
    %v755 = vpop.f32.mrb[0].mxu0
    %v756 = vadd.f32 %v335, %v755
    %v757 = vpop.f32.mrb[0].mxu0
    %v758 = vadd.f32 %v339, %v757
    %v759 = vpop.f32.mrb[0].mxu0
    %v760 = vpop.f32.mrb[0].mxu0
    %761 = vdwg.mxu0
    %v762 = vmax.f32 %v715, 0.0
    %v763 = vmax.f32 %v717, 0.0
    %v764 = vmax.f32 %v756, 0.0
    %v765 = vmax.f32 %v758, 0.0
    %v766 = vld [vmem:[%s7] sm:$0xf]
    %v767 = vld [vmem:[%s8] sm:$0xf]
    %v768 = vsel %vm176, %v762, 0.0
    %v769 = vsel %vm176, %v763, 0.0
    %v770 = vadd.f32 %v768, %v769
    %v771 = vsel %vm176, %v764, 0.0
    %v772 = vadd.f32 %v770, %v771
    %v773 = vsel %vm176, %v765, 0.0
    %v774 = vadd.f32 %v772, %v773
    %775 = vadd.xlane.f32.xlu0 %v774
    %v776 = vpop.xlane.xlu0 %775
    %v777 = vmul.f32 %v762, %v762
    %v778 = vmul.f32 %v763, %v763
    %v779 = vmul.f32 %v764, %v764
    %v780 = vmul.f32 %v765, %v765
    %v781 = vsel %vm176, %v777, 0.0
    %v782 = vsel %vm176, %v778, 0.0
    %v783 = vadd.f32 %v781, %v782
    %v784 = vsel %vm176, %v779, 0.0
    %v785 = vadd.f32 %v783, %v784
    %v786 = vsel %vm176, %v780, 0.0
    %v787 = vadd.f32 %v785, %v786
    %788 = vadd.xlane.f32.xlu0 %v787
    %v789 = vpop.xlane.xlu0 %788
    %v790 = vmul.f32 %v776, 0.001953125
    %v791 = vmul.f32 %v789, 0.001953125
    %v792 = vmul.f32 %v790, %v790
    %v793 = vsub.f32 %v791, %v792
    %v794 = vmax.f32 %v793, 0.0
    %v795 = vsub.f32 %v762, %v790
    %v796 = vsub.f32 %v763, %v790
    %v797 = vsub.f32 %v764, %v790
    %v798 = vsub.f32 %v765, %v790
    %v799 = vadd.f32 %v794, 1e-05
    %v800 = vrsqrt.pop %v799
    %v801 = vmul.f32 %v795, %v800
    %v802 = vmul.f32 %v796, %v800
    %v803 = vmul.f32 %v797, %v800
    %v804 = vmul.f32 %v798, %v800
    %v806 = vlaneseq
    %v807 = vshrl.u32 %v806, 7
    %v808 = vsub.s32 0, %v807
    %v809 = vrot.slane %v766, %v808
    %v810 = vlaneseq
    %v811 = vshrl.u32 %v810, 7
    %v812 = vsub.s32 1, %v811
    %v813 = vrot.slane %v766, %v812
    %v814 = vlaneseq
    %v815 = vshrl.u32 %v814, 7
    %v816 = vsub.s32 2, %v815
    %v817 = vrot.slane %v766, %v816
    %v818 = vlaneseq
    %v819 = vshrl.u32 %v818, 7
    %v820 = vsub.s32 3, %v819
    %v821 = vrot.slane %v766, %v820
    %v826 = vmul.f32 %v801, %v809
    %v827 = vmul.f32 %v802, %v813
    %v828 = vmul.f32 %v803, %v817
    %v829 = vmul.f32 %v804, %v821
    %v831 = vlaneseq
    %v832 = vshrl.u32 %v831, 7
    %v833 = vsub.s32 0, %v832
    %v834 = vrot.slane %v767, %v833
    %v835 = vlaneseq
    %v836 = vshrl.u32 %v835, 7
    %v837 = vsub.s32 1, %v836
    %v838 = vrot.slane %v767, %v837
    %v839 = vlaneseq
    %v840 = vshrl.u32 %v839, 7
    %v841 = vsub.s32 2, %v840
    %v842 = vrot.slane %v767, %v841
    %v843 = vlaneseq
    %v844 = vshrl.u32 %v843, 7
    %v845 = vsub.s32 3, %v844
    %v846 = vrot.slane %v767, %v845
    %v851 = vadd.f32 %v826, %v834
    %v852 = vadd.f32 %v827, %v838
    %v853 = vadd.f32 %v828, %v842
    %v854 = vadd.f32 %v829, %v846
    %v855 = vpack.c.bf16 %v851, %v851
    %v856 = vpack.c.bf16 %v852, %v852
    %v857 = vpack.c.bf16 %v853, %v853
    %v858 = vpack.c.bf16 %v854, %v854
    %v859 = vld [vmem:[#allocation9] sm:$0xff]
    %v860 = vld [vmem:[#allocation9 + $0x8] sm:$0xff]
    %v861 = vld [vmem:[#allocation9 + $0x10] sm:$0xff]
    %v862 = vld [vmem:[#allocation9 + $0x18] sm:$0xff]
    %v863 = vld [vmem:[#allocation9 + $0x20] sm:$0xff]
    %v864 = vld [vmem:[#allocation9 + $0x28] sm:$0xff]
    %v865 = vld [vmem:[#allocation9 + $0x30] sm:$0xff]
    %v866 = vld [vmem:[#allocation9 + $0x38] sm:$0xff]
    %v867 = vld [vmem:[#allocation9 + $0x40] sm:$0xff]
    %v868 = vld [vmem:[#allocation9 + $0x48] sm:$0xff]
    %v869 = vld [vmem:[#allocation9 + $0x50] sm:$0xff]
    %v870 = vld [vmem:[#allocation9 + $0x58] sm:$0xff]
    %v871 = vld [vmem:[#allocation9 + $0x60] sm:$0xff]
    %v872 = vld [vmem:[#allocation9 + $0x68] sm:$0xff]
    %v873 = vld [vmem:[#allocation9 + $0x70] sm:$0xff]
    %v874 = vld [vmem:[#allocation9 + $0x78] sm:$0xff]
    %v875 = vld [vmem:[#allocation9 + $0x80] sm:$0xff]
    %v876 = vld [vmem:[#allocation9 + $0x88] sm:$0xff]
    %v877 = vld [vmem:[#allocation9 + $0x90] sm:$0xff]
    %v878 = vld [vmem:[#allocation9 + $0x98] sm:$0xff]
    %v879 = vld [vmem:[#allocation9 + $0xa0] sm:$0xff]
    %v880 = vld [vmem:[#allocation9 + $0xa8] sm:$0xff]
    %v881 = vld [vmem:[#allocation9 + $0xb0] sm:$0xff]
    %v882 = vld [vmem:[#allocation9 + $0xb8] sm:$0xff]
    %v883 = vld [vmem:[#allocation9 + $0xc0] sm:$0xff]
    %v884 = vld [vmem:[#allocation9 + $0xc8] sm:$0xff]
    %v885 = vld [vmem:[#allocation9 + $0xd0] sm:$0xff]
    %v886 = vld [vmem:[#allocation9 + $0xd8] sm:$0xff]
    %v887 = vld [vmem:[#allocation9 + $0xe0] sm:$0xff]
    %v888 = vld [vmem:[#allocation9 + $0xe8] sm:$0xff]
    %v889 = vld [vmem:[#allocation9 + $0xf0] sm:$0xff]
    %v890 = vld [vmem:[#allocation9 + $0xf8] sm:$0xff]
    %v891 = vld [vmem:[#allocation9 + $0x100] sm:$0xff]
    %v892 = vld [vmem:[#allocation9 + $0x108] sm:$0xff]
    %v893 = vld [vmem:[#allocation9 + $0x110] sm:$0xff]
    %v894 = vld [vmem:[#allocation9 + $0x118] sm:$0xff]
    %v895 = vld [vmem:[#allocation9 + $0x120] sm:$0xff]
    %v896 = vld [vmem:[#allocation9 + $0x128] sm:$0xff]
    %v897 = vld [vmem:[#allocation9 + $0x130] sm:$0xff]
    %v898 = vld [vmem:[#allocation9 + $0x138] sm:$0xff]
    %v899 = vld [vmem:[#allocation9 + $0x140] sm:$0xff]
    %v900 = vld [vmem:[#allocation9 + $0x148] sm:$0xff]
    %v901 = vld [vmem:[#allocation9 + $0x150] sm:$0xff]
    %v902 = vld [vmem:[#allocation9 + $0x158] sm:$0xff]
    %v903 = vld [vmem:[#allocation9 + $0x160] sm:$0xff]
    %v904 = vld [vmem:[#allocation9 + $0x168] sm:$0xff]
    %v905 = vld [vmem:[#allocation9 + $0x170] sm:$0xff]
    %v906 = vld [vmem:[#allocation9 + $0x178] sm:$0xff]
    %v907 = vld [vmem:[#allocation9 + $0x180] sm:$0xff]
    %v908 = vld [vmem:[#allocation9 + $0x188] sm:$0xff]
    %v909 = vld [vmem:[#allocation9 + $0x190] sm:$0xff]
    %v910 = vld [vmem:[#allocation9 + $0x198] sm:$0xff]
    %v911 = vld [vmem:[#allocation9 + $0x1a0] sm:$0xff]
    %v912 = vld [vmem:[#allocation9 + $0x1a8] sm:$0xff]
    %v913 = vld [vmem:[#allocation9 + $0x1b0] sm:$0xff]
    %v914 = vld [vmem:[#allocation9 + $0x1b8] sm:$0xff]
    %v915 = vld [vmem:[#allocation9 + $0x1c0] sm:$0xff]
    %v916 = vld [vmem:[#allocation9 + $0x1c8] sm:$0xff]
    %v917 = vld [vmem:[#allocation9 + $0x1d0] sm:$0xff]
    %v918 = vld [vmem:[#allocation9 + $0x1d8] sm:$0xff]
    %v919 = vld [vmem:[#allocation9 + $0x1e0] sm:$0xff]
    %v920 = vld [vmem:[#allocation9 + $0x1e8] sm:$0xff]
    %v921 = vld [vmem:[#allocation9 + $0x1f0] sm:$0xff]
    %v922 = vld [vmem:[#allocation9 + $0x1f8] sm:$0xff]
    %v923 = vld [vmem:[%s10] sm:$0x3]
    %v925 = vlaneseq
    %v926 = vshrl.u32 %v925, 7
    %v927 = vsub.s32 0, %v926
    %v928 = vrot.slane %v923, %v927
    %v929 = vlaneseq
    %v930 = vshrl.u32 %v929, 7
    %v931 = vsub.s32 1, %v930
    %v932 = vrot.slane %v923, %v931
    %v999 = vunpack.c.l.b16 %v859
    %v1000 = vunpack.c.h.b16 %v859
    %v1001 = vunpack.c.l.b16 %v860
    %v1002 = vunpack.c.h.b16 %v860
    %v1003 = vunpack.c.l.b16 %v861
    %v1004 = vunpack.c.h.b16 %v861
    %v1005 = vunpack.c.l.b16 %v862
    %v1006 = vunpack.c.h.b16 %v862
    %v1007 = vunpack.c.l.b16 %v863
    %v1008 = vunpack.c.h.b16 %v863
    %v1009 = vunpack.c.l.b16 %v864
    %v1010 = vunpack.c.h.b16 %v864
    %v1011 = vunpack.c.l.b16 %v865
    %v1012 = vunpack.c.h.b16 %v865
    %v1013 = vunpack.c.l.b16 %v866
    %v1014 = vunpack.c.h.b16 %v866
    %v1015 = vunpack.c.l.b16 %v867
    %v1016 = vunpack.c.h.b16 %v867
    %v1017 = vunpack.c.l.b16 %v868
    %v1018 = vunpack.c.h.b16 %v868
    %v1019 = vunpack.c.l.b16 %v869
    %v1020 = vunpack.c.h.b16 %v869
    %v1021 = vunpack.c.l.b16 %v870
    %v1022 = vunpack.c.h.b16 %v870
    %v1023 = vunpack.c.l.b16 %v871
    %v1024 = vunpack.c.h.b16 %v871
    %v1025 = vunpack.c.l.b16 %v872
    %v1026 = vunpack.c.h.b16 %v872
    %v1027 = vunpack.c.l.b16 %v873
    %v1028 = vunpack.c.h.b16 %v873
    %v1029 = vunpack.c.l.b16 %v874
    %v1030 = vunpack.c.h.b16 %v874
    %v1031 = vunpack.c.l.b16 %v875
    %v1032 = vunpack.c.h.b16 %v875
    %v1033 = vunpack.c.l.b16 %v876
    %v1034 = vunpack.c.h.b16 %v876
    %v1035 = vunpack.c.l.b16 %v877
    %v1036 = vunpack.c.h.b16 %v877
    %v1037 = vunpack.c.l.b16 %v878
    %v1038 = vunpack.c.h.b16 %v878
    %v1039 = vunpack.c.l.b16 %v879
    %v1040 = vunpack.c.h.b16 %v879
    %v1041 = vunpack.c.l.b16 %v880
    %v1042 = vunpack.c.h.b16 %v880
    %v1043 = vunpack.c.l.b16 %v881
    %v1044 = vunpack.c.h.b16 %v881
    %v1045 = vunpack.c.l.b16 %v882
    %v1046 = vunpack.c.h.b16 %v882
    %v1047 = vunpack.c.l.b16 %v883
    %v1048 = vunpack.c.h.b16 %v883
    %v1049 = vunpack.c.l.b16 %v884
    %v1050 = vunpack.c.h.b16 %v884
    %v1051 = vunpack.c.l.b16 %v885
    %v1052 = vunpack.c.h.b16 %v885
    %v1053 = vunpack.c.l.b16 %v886
    %v1054 = vunpack.c.h.b16 %v886
    %v1055 = vunpack.c.l.b16 %v887
    %v1056 = vunpack.c.h.b16 %v887
    %v1057 = vunpack.c.l.b16 %v888
    %v1058 = vunpack.c.h.b16 %v888
    %v1059 = vunpack.c.l.b16 %v889
    %v1060 = vunpack.c.h.b16 %v889
    %v1061 = vunpack.c.l.b16 %v890
    %v1062 = vunpack.c.h.b16 %v890
    %v1063 = vunpack.c.l.b16 %v891
    %v1064 = vunpack.c.h.b16 %v891
    %v1065 = vunpack.c.l.b16 %v892
    %v1066 = vunpack.c.h.b16 %v892
    %v1067 = vunpack.c.l.b16 %v893
    %v1068 = vunpack.c.h.b16 %v893
    %v1069 = vunpack.c.l.b16 %v894
    %v1070 = vunpack.c.h.b16 %v894
    %v1071 = vunpack.c.l.b16 %v895
    %v1072 = vunpack.c.h.b16 %v895
    %v1073 = vunpack.c.l.b16 %v896
    %v1074 = vunpack.c.h.b16 %v896
    %v1075 = vunpack.c.l.b16 %v897
    %v1076 = vunpack.c.h.b16 %v897
    %v1077 = vunpack.c.l.b16 %v898
    %v1078 = vunpack.c.h.b16 %v898
    %v1079 = vunpack.c.l.b16 %v899
    %v1080 = vunpack.c.h.b16 %v899
    %v1081 = vunpack.c.l.b16 %v900
    %v1082 = vunpack.c.h.b16 %v900
    %v1083 = vunpack.c.l.b16 %v901
    %v1084 = vunpack.c.h.b16 %v901
    %v1085 = vunpack.c.l.b16 %v902
    %v1086 = vunpack.c.h.b16 %v902
    %v1087 = vunpack.c.l.b16 %v903
    %v1088 = vunpack.c.h.b16 %v903
    %v1089 = vunpack.c.l.b16 %v904
    %v1090 = vunpack.c.h.b16 %v904
    %v1091 = vunpack.c.l.b16 %v905
    %v1092 = vunpack.c.h.b16 %v905
    %v1093 = vunpack.c.l.b16 %v906
    %v1094 = vunpack.c.h.b16 %v906
    %v1095 = vunpack.c.l.b16 %v907
    %v1096 = vunpack.c.h.b16 %v907
    %v1097 = vunpack.c.l.b16 %v908
    %v1098 = vunpack.c.h.b16 %v908
    %v1099 = vunpack.c.l.b16 %v909
    %v1100 = vunpack.c.h.b16 %v909
    %v1101 = vunpack.c.l.b16 %v910
    %v1102 = vunpack.c.h.b16 %v910
    %v1103 = vunpack.c.l.b16 %v911
    %v1104 = vunpack.c.h.b16 %v911
    %v1105 = vunpack.c.l.b16 %v912
    %v1106 = vunpack.c.h.b16 %v912
    %v1107 = vunpack.c.l.b16 %v913
    %v1108 = vunpack.c.h.b16 %v913
    %v1109 = vunpack.c.l.b16 %v914
    %v1110 = vunpack.c.h.b16 %v914
    %v1111 = vunpack.c.l.b16 %v915
    %v1112 = vunpack.c.h.b16 %v915
    %v1113 = vunpack.c.l.b16 %v916
    %v1114 = vunpack.c.h.b16 %v916
    %v1115 = vunpack.c.l.b16 %v917
    %v1116 = vunpack.c.h.b16 %v917
    %v1117 = vunpack.c.l.b16 %v918
    %v1118 = vunpack.c.h.b16 %v918
    %v1119 = vunpack.c.l.b16 %v919
    %v1120 = vunpack.c.h.b16 %v919
    %v1121 = vunpack.c.l.b16 %v920
    %v1122 = vunpack.c.h.b16 %v920
    %v1123 = vunpack.c.l.b16 %v921
    %v1124 = vunpack.c.h.b16 %v921
    %v1125 = vunpack.c.l.b16 %v922
    %v1126 = vunpack.c.h.b16 %v922
    %v1127 = vpack.c.b16 %v1001, %v999
    %v1128 = vpack.c.b16 %v1002, %v1000
    %v1129 = vpack.c.b16 %v1005, %v1003
    %v1130 = vpack.c.b16 %v1006, %v1004
    %v1131 = vpack.c.b16 %v1009, %v1007
    %v1132 = vpack.c.b16 %v1010, %v1008
    %v1133 = vpack.c.b16 %v1013, %v1011
    %v1134 = vpack.c.b16 %v1014, %v1012
    %v1135 = vpack.c.b16 %v1017, %v1015
    %v1136 = vpack.c.b16 %v1018, %v1016
    %v1137 = vpack.c.b16 %v1021, %v1019
    %v1138 = vpack.c.b16 %v1022, %v1020
    %v1139 = vpack.c.b16 %v1025, %v1023
    %v1140 = vpack.c.b16 %v1026, %v1024
    %v1141 = vpack.c.b16 %v1029, %v1027
    %v1142 = vpack.c.b16 %v1030, %v1028
    %v1143 = vpack.c.b16 %v1033, %v1031
    %v1144 = vpack.c.b16 %v1034, %v1032
    %v1145 = vpack.c.b16 %v1037, %v1035
    %v1146 = vpack.c.b16 %v1038, %v1036
    %v1147 = vpack.c.b16 %v1041, %v1039
    %v1148 = vpack.c.b16 %v1042, %v1040
    %v1149 = vpack.c.b16 %v1045, %v1043
    %v1150 = vpack.c.b16 %v1046, %v1044
    %v1151 = vpack.c.b16 %v1049, %v1047
    %v1152 = vpack.c.b16 %v1050, %v1048
    %v1153 = vpack.c.b16 %v1053, %v1051
    %v1154 = vpack.c.b16 %v1054, %v1052
    %v1155 = vpack.c.b16 %v1057, %v1055
    %v1156 = vpack.c.b16 %v1058, %v1056
    %v1157 = vpack.c.b16 %v1061, %v1059
    %v1158 = vpack.c.b16 %v1062, %v1060
    %v1159 = vpack.c.b16 %v1065, %v1063
    %v1160 = vpack.c.b16 %v1066, %v1064
    %v1161 = vpack.c.b16 %v1069, %v1067
    %v1162 = vpack.c.b16 %v1070, %v1068
    %v1163 = vpack.c.b16 %v1073, %v1071
    %v1164 = vpack.c.b16 %v1074, %v1072
    %v1165 = vpack.c.b16 %v1077, %v1075
    %v1166 = vpack.c.b16 %v1078, %v1076
    %v1167 = vpack.c.b16 %v1081, %v1079
    %v1168 = vpack.c.b16 %v1082, %v1080
    %v1169 = vpack.c.b16 %v1085, %v1083
    %v1170 = vpack.c.b16 %v1086, %v1084
    %v1171 = vpack.c.b16 %v1089, %v1087
    %v1172 = vpack.c.b16 %v1090, %v1088
    %v1173 = vpack.c.b16 %v1093, %v1091
    %v1174 = vpack.c.b16 %v1094, %v1092
    %v1175 = vpack.c.b16 %v1097, %v1095
    %v1176 = vpack.c.b16 %v1098, %v1096
    %v1177 = vpack.c.b16 %v1101, %v1099
    %v1178 = vpack.c.b16 %v1102, %v1100
    %v1179 = vpack.c.b16 %v1105, %v1103
    %v1180 = vpack.c.b16 %v1106, %v1104
    %v1181 = vpack.c.b16 %v1109, %v1107
    %v1182 = vpack.c.b16 %v1110, %v1108
    %v1183 = vpack.c.b16 %v1113, %v1111
    %v1184 = vpack.c.b16 %v1114, %v1112
    %v1185 = vpack.c.b16 %v1117, %v1115
    %v1186 = vpack.c.b16 %v1118, %v1116
    %v1187 = vpack.c.b16 %v1121, %v1119
    %v1188 = vpack.c.b16 %v1122, %v1120
    %v1189 = vpack.c.b16 %v1125, %v1123
    %v1190 = vpack.c.b16 %v1126, %v1124
    %1255 = vmatprep.subr.bf16.mxu0 %v1128
    %1256 = vmatpush1.bf16.msra.mxu0 %v1127
    %1257 = vmatprep.subr.bf16.mxu0 %v1130
    %1258 = vmatpush1.bf16.msra.mxu0 %v1129
    %1259 = vmatprep.subr.bf16.mxu0 %v1132
    %1260 = vmatpush1.bf16.msra.mxu0 %v1131
    %1261 = vmatprep.subr.bf16.mxu0 %v1134
    %1262 = vmatpush1.bf16.msra.mxu0 %v1133
    %1263 = vmatprep.subr.bf16.mxu0 %v1136
    %1264 = vmatpush1.bf16.msra.mxu0 %v1135
    %1265 = vmatprep.subr.bf16.mxu0 %v1138
    %1266 = vmatpush1.bf16.msra.mxu0 %v1137
    %1267 = vmatprep.subr.bf16.mxu0 %v1140
    %1268 = vmatpush1.bf16.msra.mxu0 %v1139
    %1269 = vmatprep.subr.bf16.mxu0 %v1142
    %1270 = vmatpush1.bf16.msra.mxu0 %v1141
    %1271 = vmatprep.subr.bf16.mxu0 %v1144
    %1272 = vmatpush1.bf16.msra.mxu0 %v1143
    %1273 = vmatprep.subr.bf16.mxu0 %v1146
    %1274 = vmatpush1.bf16.msra.mxu0 %v1145
    %1275 = vmatprep.subr.bf16.mxu0 %v1148
    %1276 = vmatpush1.bf16.msra.mxu0 %v1147
    %1277 = vmatprep.subr.bf16.mxu0 %v1150
    %1278 = vmatpush1.bf16.msra.mxu0 %v1149
    %1279 = vmatprep.subr.bf16.mxu0 %v1152
    %1280 = vmatpush1.bf16.msra.mxu0 %v1151
    %1281 = vmatprep.subr.bf16.mxu0 %v1154
    %1282 = vmatpush1.bf16.msra.mxu0 %v1153
    %1283 = vmatprep.subr.bf16.mxu0 %v1156
    %1284 = vmatpush1.bf16.msra.mxu0 %v1155
    %1285 = vmatprep.subr.bf16.mxu0 %v1158
    %1286 = vmatpush1.bf16.msra.mxu0 %v1157
    %1287 = vmatprep.mubr.bf16.mxu0 %v856
    %1288 = vmatmul.mubr.bf16.gmra.mrb[0].mxu0 %v855
    %v1289 = vpop.f32.mrb[0].mxu0
    %v1290 = vadd.f32 %v928, %v1289
    %v1291 = vpop.f32.mrb[0].mxu0
    %v1292 = vadd.f32 %v932, %v1291
    %v1293 = vpop.f32.mrb[0].mxu0
    %v1294 = vpop.f32.mrb[0].mxu0
    %1295 = vdwg.mxu0
    %1296 = vmatprep.subr.bf16.mxu0 %v1160
    %1297 = vmatpush1.bf16.msra.mxu0 %v1159
    %1298 = vmatprep.subr.bf16.mxu0 %v1162
    %1299 = vmatpush1.bf16.msra.mxu0 %v1161
    %1300 = vmatprep.subr.bf16.mxu0 %v1164
    %1301 = vmatpush1.bf16.msra.mxu0 %v1163
    %1302 = vmatprep.subr.bf16.mxu0 %v1166
    %1303 = vmatpush1.bf16.msra.mxu0 %v1165
    %1304 = vmatprep.subr.bf16.mxu0 %v1168
    %1305 = vmatpush1.bf16.msra.mxu0 %v1167
    %1306 = vmatprep.subr.bf16.mxu0 %v1170
    %1307 = vmatpush1.bf16.msra.mxu0 %v1169
    %1308 = vmatprep.subr.bf16.mxu0 %v1172
    %1309 = vmatpush1.bf16.msra.mxu0 %v1171
    %1310 = vmatprep.subr.bf16.mxu0 %v1174
    %1311 = vmatpush1.bf16.msra.mxu0 %v1173
    %1312 = vmatprep.subr.bf16.mxu0 %v1176
    %1313 = vmatpush1.bf16.msra.mxu0 %v1175
    %1314 = vmatprep.subr.bf16.mxu0 %v1178
    %1315 = vmatpush1.bf16.msra.mxu0 %v1177
    %1316 = vmatprep.subr.bf16.mxu0 %v1180
    %1317 = vmatpush1.bf16.msra.mxu0 %v1179
    %1318 = vmatprep.subr.bf16.mxu0 %v1182
    %1319 = vmatpush1.bf16.msra.mxu0 %v1181
    %1320 = vmatprep.subr.bf16.mxu0 %v1184
    %1321 = vmatpush1.bf16.msra.mxu0 %v1183
    %1322 = vmatprep.subr.bf16.mxu0 %v1186
    %1323 = vmatpush1.bf16.msra.mxu0 %v1185
    %1324 = vmatprep.subr.bf16.mxu0 %v1188
    %1325 = vmatpush1.bf16.msra.mxu0 %v1187
    %1326 = vmatprep.subr.bf16.mxu0 %v1190
    %1327 = vmatpush1.bf16.msra.mxu0 %v1189
    %1328 = vmatprep.mubr.bf16.mxu0 %v858
    %1329 = vmatmul.mubr.bf16.gmra.mrb[0].mxu0 %v857
    %v1330 = vpop.f32.mrb[0].mxu0
    %v1331 = vadd.f32 %v1290, %v1330
    %v1332 = vpop.f32.mrb[0].mxu0
    %v1333 = vadd.f32 %v1292, %v1332
    %v1334 = vpop.f32.mrb[0].mxu0
    %v1335 = vpop.f32.mrb[0].mxu0
    %1336 = vdwg.mxu0
    %v1337 = vmax.f32 %v1331, 0.0
    %v1338 = vmax.f32 %v1333, 0.0
    %v1339 = vld [vmem:[%s11] sm:$0x3]
    %v1340 = vld [vmem:[%s12] sm:$0x3]
    %v1341 = vsel %vm176, %v1337, 0.0
    %v1342 = vsel %vm176, %v1338, 0.0
    %v1343 = vadd.f32 %v1341, %v1342
    %1344 = vadd.xlane.f32.xlu0 %v1343
    %v1345 = vpop.xlane.xlu0 %1344
    %v1346 = vmul.f32 %v1337, %v1337
    %v1347 = vmul.f32 %v1338, %v1338
    %v1348 = vsel %vm176, %v1346, 0.0
    %v1349 = vsel %vm176, %v1347, 0.0
    %v1350 = vadd.f32 %v1348, %v1349
    %1351 = vadd.xlane.f32.xlu0 %v1350
    %v1352 = vpop.xlane.xlu0 %1351
    %v1353 = vmul.f32 %v1345, 0.00390625
    %v1354 = vmul.f32 %v1352, 0.00390625
    %v1355 = vmul.f32 %v1353, %v1353
    %v1356 = vsub.f32 %v1354, %v1355
    %v1357 = vmax.f32 %v1356, 0.0
    %v1358 = vsub.f32 %v1337, %v1353
    %v1359 = vsub.f32 %v1338, %v1353
    %v1360 = vadd.f32 %v1357, 1e-05
    %v1361 = vrsqrt.pop %v1360
    %v1362 = vmul.f32 %v1358, %v1361
    %v1363 = vmul.f32 %v1359, %v1361
    %v1365 = vlaneseq
    %v1366 = vshrl.u32 %v1365, 7
    %v1367 = vsub.s32 0, %v1366
    %v1368 = vrot.slane %v1339, %v1367
    %v1369 = vlaneseq
    %v1370 = vshrl.u32 %v1369, 7
    %v1371 = vsub.s32 1, %v1370
    %v1372 = vrot.slane %v1339, %v1371
    %v1375 = vmul.f32 %v1362, %v1368
    %v1376 = vmul.f32 %v1363, %v1372
    %v1378 = vlaneseq
    %v1379 = vshrl.u32 %v1378, 7
    %v1380 = vsub.s32 0, %v1379
    %v1381 = vrot.slane %v1340, %v1380
    %v1382 = vlaneseq
    %v1383 = vshrl.u32 %v1382, 7
    %v1384 = vsub.s32 1, %v1383
    %v1385 = vrot.slane %v1340, %v1384
    %v1388 = vadd.f32 %v1375, %v1381
    %v1389 = vadd.f32 %v1376, %v1385
    %v1390 = vmax.f32 %v1388, 0.0
    %v1391 = vmax.f32 %v1389, 0.0
    %v1392 = vpack.c.bf16 %v1390, %v1390
    %v1393 = vpack.c.bf16 %v1391, %v1391
    %v1394 = vld [vmem:[%s13] sm:$0xf]
    %v1395 = vld [vmem:[%s13 + $0x4] sm:$0xf]
    %v1396 = vld [vmem:[%s13 + $0x8] sm:$0xf]
    %v1397 = vld [vmem:[%s13 + $0xc] sm:$0xf]
    %v1398 = vld [vmem:[%s13 + $0x10] sm:$0xf]
    %v1399 = vld [vmem:[%s13 + $0x14] sm:$0xf]
    %v1400 = vld [vmem:[%s13 + $0x18] sm:$0xf]
    %v1401 = vld [vmem:[%s13 + $0x1c] sm:$0xf]
    %v1402 = vld [vmem:[%s13 + $0x20] sm:$0xf]
    %v1403 = vld [vmem:[%s13 + $0x24] sm:$0xf]
    %v1404 = vld [vmem:[%s13 + $0x28] sm:$0xf]
    %v1405 = vld [vmem:[%s13 + $0x2c] sm:$0xf]
    %v1406 = vld [vmem:[%s13 + $0x30] sm:$0xf]
    %v1407 = vld [vmem:[%s13 + $0x34] sm:$0xf]
    %v1408 = vld [vmem:[%s13 + $0x38] sm:$0xf]
    %v1409 = vld [vmem:[%s13 + $0x3c] sm:$0xf]
    %v1410 = vld [vmem:[%s13 + $0x40] sm:$0xf]
    %v1411 = vld [vmem:[%s13 + $0x44] sm:$0xf]
    %v1412 = vld [vmem:[%s13 + $0x48] sm:$0xf]
    %v1413 = vld [vmem:[%s13 + $0x4c] sm:$0xf]
    %v1414 = vld [vmem:[%s13 + $0x50] sm:$0xf]
    %v1415 = vld [vmem:[%s13 + $0x54] sm:$0xf]
    %v1416 = vld [vmem:[%s13 + $0x58] sm:$0xf]
    %v1417 = vld [vmem:[%s13 + $0x5c] sm:$0xf]
    %v1418 = vld [vmem:[%s13 + $0x60] sm:$0xf]
    %v1419 = vld [vmem:[%s13 + $0x64] sm:$0xf]
    %v1420 = vld [vmem:[%s13 + $0x68] sm:$0xf]
    %v1421 = vld [vmem:[%s13 + $0x6c] sm:$0xf]
    %v1422 = vld [vmem:[%s13 + $0x70] sm:$0xf]
    %v1423 = vld [vmem:[%s13 + $0x74] sm:$0xf]
    %v1424 = vld [vmem:[%s13 + $0x78] sm:$0xf]
    %v1425 = vld [vmem:[%s13 + $0x7c] sm:$0xf]
    %v1426 = vld [vmem:[%s14] sm:$0x1]
    %v1428 = vlaneseq
    %v1429 = vshrl.u32 %v1428, 7
    %v1430 = vsub.s32 0, %v1429
    %v1431 = vrot.slane %v1426, %v1430
    %v1465 = vunpack.c.l.b16 %v1394
    %v1466 = vunpack.c.l.b16 %v1395
    %v1467 = vunpack.c.l.b16 %v1396
    %v1468 = vunpack.c.l.b16 %v1397
    %v1469 = vunpack.c.l.b16 %v1398
    %v1470 = vunpack.c.l.b16 %v1399
    %v1471 = vunpack.c.l.b16 %v1400
    %v1472 = vunpack.c.l.b16 %v1401
    %v1473 = vunpack.c.l.b16 %v1402
    %v1474 = vunpack.c.l.b16 %v1403
    %v1475 = vunpack.c.l.b16 %v1404
    %v1476 = vunpack.c.l.b16 %v1405
    %v1477 = vunpack.c.l.b16 %v1406
    %v1478 = vunpack.c.l.b16 %v1407
    %v1479 = vunpack.c.l.b16 %v1408
    %v1480 = vunpack.c.l.b16 %v1409
    %v1481 = vunpack.c.l.b16 %v1410
    %v1482 = vunpack.c.l.b16 %v1411
    %v1483 = vunpack.c.l.b16 %v1412
    %v1484 = vunpack.c.l.b16 %v1413
    %v1485 = vunpack.c.l.b16 %v1414
    %v1486 = vunpack.c.l.b16 %v1415
    %v1487 = vunpack.c.l.b16 %v1416
    %v1488 = vunpack.c.l.b16 %v1417
    %v1489 = vunpack.c.l.b16 %v1418
    %v1490 = vunpack.c.l.b16 %v1419
    %v1491 = vunpack.c.l.b16 %v1420
    %v1492 = vunpack.c.l.b16 %v1421
    %v1493 = vunpack.c.l.b16 %v1422
    %v1494 = vunpack.c.l.b16 %v1423
    %v1495 = vunpack.c.l.b16 %v1424
    %v1496 = vunpack.c.l.b16 %v1425
    %v1497 = vpack.c.b16 %v1466, %v1465
    %v1498 = vpack.c.b16 %v1468, %v1467
    %v1499 = vpack.c.b16 %v1470, %v1469
    %v1500 = vpack.c.b16 %v1472, %v1471
    %v1501 = vpack.c.b16 %v1474, %v1473
    %v1502 = vpack.c.b16 %v1476, %v1475
    %v1503 = vpack.c.b16 %v1478, %v1477
    %v1504 = vpack.c.b16 %v1480, %v1479
    %v1505 = vpack.c.b16 %v1482, %v1481
    %v1506 = vpack.c.b16 %v1484, %v1483
    %v1507 = vpack.c.b16 %v1486, %v1485
    %v1508 = vpack.c.b16 %v1488, %v1487
    %v1509 = vpack.c.b16 %v1490, %v1489
    %v1510 = vpack.c.b16 %v1492, %v1491
    %v1511 = vpack.c.b16 %v1494, %v1493
    %v1512 = vpack.c.b16 %v1496, %v1495
    %1529 = vmatprep.subr.bf16.mxu0 0
    %1530 = vmatpush1.bf16.msra.mxu0 %v1497
    %1531 = vmatprep.subr.bf16.mxu0 0
    %1532 = vmatpush1.bf16.msra.mxu0 %v1498
    %1533 = vmatprep.subr.bf16.mxu0 0
    %1534 = vmatpush1.bf16.msra.mxu0 %v1499
    %1535 = vmatprep.subr.bf16.mxu0 0
    %1536 = vmatpush1.bf16.msra.mxu0 %v1500
    %1537 = vmatprep.subr.bf16.mxu0 0
    %1538 = vmatpush1.bf16.msra.mxu0 %v1501
    %1539 = vmatprep.subr.bf16.mxu0 0
    %1540 = vmatpush1.bf16.msra.mxu0 %v1502
    %1541 = vmatprep.subr.bf16.mxu0 0
    %1542 = vmatpush1.bf16.msra.mxu0 %v1503
    %1543 = vmatprep.subr.bf16.mxu0 0
    %1544 = vmatpush1.bf16.msra.mxu0 %v1504
    %1545 = vmatprep.subr.bf16.mxu0 0
    %1546 = vmatpush1.bf16.msra.mxu0 %v1505
    %1547 = vmatprep.subr.bf16.mxu0 0
    %1548 = vmatpush1.bf16.msra.mxu0 %v1506
    %1549 = vmatprep.subr.bf16.mxu0 0
    %1550 = vmatpush1.bf16.msra.mxu0 %v1507
    %1551 = vmatprep.subr.bf16.mxu0 0
    %1552 = vmatpush1.bf16.msra.mxu0 %v1508
    %1553 = vmatprep.subr.bf16.mxu0 0
    %1554 = vmatpush1.bf16.msra.mxu0 %v1509
    %1555 = vmatprep.subr.bf16.mxu0 0
    %1556 = vmatpush1.bf16.msra.mxu0 %v1510
    %1557 = vmatprep.subr.bf16.mxu0 0
    %1558 = vmatpush1.bf16.msra.mxu0 %v1511
    %1559 = vmatprep.subr.bf16.mxu0 0
    %1560 = vmatpush1.bf16.msra.mxu0 %v1512
    %1561 = vmatprep.mubr.bf16.mxu0 %v1393
    %1562 = vmatmul.mubr.bf16.gmra.mrb[0].mxu0 %v1392
    %v1563 = vpop.f32.mrb[0].mxu0
    %v1564 = vadd.f32 %v1431, %v1563
    %v1565 = vpop.f32.mrb[0].mxu0
    %v1566 = vpop.f32.mrb[0].mxu0
    %v1567 = vpop.f32.mrb[0].mxu0
    %1568 = vdwg.mxu0
    %v1569 = vld [vmem:[%s15] sm:$0x1]
    %v1571 = vlaneseq
    %v1572 = vshrl.u32 %v1571, 7
    %v1573 = vsub.s32 0, %v1572
    %v1574 = vrot.slane %v1569, %v1573
    %v1576 = vmax.f32 %v1564, %v1574
    %v1577 = vld [vmem:[%s16] sm:$0x1]
    %v1579 = vlaneseq
    %v1580 = vshrl.u32 %v1579, 7
    %v1581 = vsub.s32 0, %v1580
    %v1582 = vrot.slane %v1577, %v1581
    %v1584 = vmin.f32 %v1576, %v1582
    %1585 = vst [vmem:[#allocation11] sm:$0x3] %v1584
    // Predicated region
    $region78: #{tpu_custom_call.1} parent=1 // pred_check
      _
    $region79: #{tpu_custom_call.1} parent=1 // pred_check_branch
      %1587 = sbr.rel (0) target = $region81
    $region80: #{tpu_custom_call.1} parent=1 // pred_region
      %s1589 = ssub.s32 32, 32
      %1590 = vsyncadd [#allocation8], %s1589
      %s1592 = sshll.u32 [#allocation11], 4
      %s1593 = int_to_ptr.vmem [resolvable:$true] %s1592
      %1595 = dma.vmem_to_hbm [thread:$0]  %s1593, 32, %s17, [#allocation8]
    $region81: #{tpu_custom_call.1} parent=1 // pred_fallthru
      _
    // Predicated region
    $region82: #{tpu_custom_call.1} parent=1 // pred_check
      _
    $region83: #{tpu_custom_call.1} parent=1 // pred_check_branch
      %1597 = sbr.rel (0) target = $region85
    $region84: #{tpu_custom_call.1} parent=1 // pred_region
      %1598 = dma.done [#allocation8], 32
    $region85: #{tpu_custom_call.1} parent=1 // pred_fallthru
      _
    %1599 = vsyncpa [#allocation7], 1
    %1600 = vsyncpa [#allocation10], 1
    %1601 = vsyncpa [#allocation8], 1

</llo_original>
